<compile_context>
chip_gen: v5e
topology: v5e:2x2
jax: 0.10.0
libtpu: 0.0.40
codegen_flags: <defaults>
</compile_context>

<pallas_src>
import functools

import jax
import jax.numpy as jnp
from jax import lax
from jax.experimental import pallas as pl
from jax.experimental.pallas import tpu as pltpu


# -----------------------------------------------------------------------------
# Kernel
# -----------------------------------------------------------------------------
def _lstm_model_kernel(x_ref, we_ref, be_ref,
                       wih0_ref, whh0_ref, b0_ref,
                       wih1_ref, whh1_ref, b1_ref,
                       wih2_ref, whh2_ref, b2_ref,
                       wp_ref, bp_ref,
                       y_ref,
                       xproj_ref, hseq_ref,
                       *, unroll):
    f32 = jnp.float32
    T = x_ref.shape[0]
    Hg = whh0_ref.shape[0]           # packed per-gate width (multiple of 32)
    G = 4 * Hg                       # packed gate-vector width (multiple of 128)

    # --- root_map: Conv1d(input_size, embedding_size, k=1) == per-timestep linear.
    v = jnp.dot(x_ref[...], we_ref[...], preferred_element_type=f32) + be_ref[...]

    # --- layer 0: hoisted input projection for all timesteps (bias bih+bhh folded in).
    xproj_ref[...] = (jnp.dot(v, wih0_ref[...], preferred_element_type=f32)
                      + b0_ref[...])

    whh0 = whh0_ref[...]             # (Hg, 4Hg)
    wih1 = wih1_ref[...]             # (Hg, 4Hg)
    whh1 = whh1_ref[...]
    wih2 = wih2_ref[...]
    whh2 = whh2_ref[...]
    b1 = b1_ref[...]                 # (1, 4Hg)
    b2 = b2_ref[...]

    # Packed-gate activation.  Gate order is PyTorch's (i, f, g, o): lanes of the g
    # gate get a plain tanh, the others get sigmoid(x) = 0.5*tanh(0.5*x)+0.5 -- one
    # EUP tanh over the whole 4Hg-wide gate vector, per-lane scale/shift do the rest.
    lane = lax.broadcasted_iota(jnp.int32, (1, G), 1)
    is_g = jnp.logical_and(lane >= 2 * Hg, lane < 3 * Hg)
    act_scale = jnp.where(is_g, 1.0, 0.5).astype(f32)
    act_shift = jnp.where(is_g, 0.0, 0.5).astype(f32)

    def cell(gates, c):
        a = jnp.tanh(gates * act_scale) * act_scale + act_shift
        i_g = a[:, 0 * Hg:1 * Hg]
        f_g = a[:, 1 * Hg:2 * Hg]
        g_g = a[:, 2 * Hg:3 * Hg]
        o_g = a[:, 3 * Hg:4 * Hg]
        c_new = f_g * c + i_g * g_g
        h_new = o_g * jnp.tanh(c_new)
        return h_new, c_new

    zeros = jnp.zeros((1, Hg), f32)  # h_init / c_init are zeroed every forward

    # Wavefront over time: iteration i advances layer0 to t=i, layer1 to t=i-1 and
    # layer2 to t=i-2 using only the previous iteration's carries, so the three
    # chains are independent within one iteration.  Warmup / drain steps read a
    # clamped xproj row and write a clamped hseq row that a later valid iteration
    # overwrites; all such values stay finite.
    def step(i, carry):
        h0, c0, h1, c1, h2, c2 = carry

        g0 = xproj_ref[pl.ds(jnp.minimum(i, T - 1), 1), :] + jnp.dot(
            h0, whh0, preferred_element_type=f32)
        g1 = (jnp.dot(h0, wih1, preferred_element_type=f32)
              + jnp.dot(h1, whh1, preferred_element_type=f32) + b1)
        g2 = (jnp.dot(h1, wih2, preferred_element_type=f32)
              + jnp.dot(h2, whh2, preferred_element_type=f32) + b2)

        h0n, c0n = cell(g0, c0)
        h1n, c1n = cell(g1, c1)
        h2n, c2n = cell(g2, c2)

        # TODO(synk): batch these single-row stores into (8, Hg) tiles per unroll
        # window to cut vst-slot / scalar-address work on v5e.
        hseq_ref[pl.ds(jnp.maximum(i - 2, 0), 1), :] = h2n
        return h0n, c0n, h1n, c1n, h2n, c2n

    lax.fori_loop(0, T + 2, step,
                  (zeros, zeros, zeros, zeros, zeros, zeros),
                  unroll=unroll)

    # --- predictor: Conv1d(hidden_size, 1, k=1) + ReLU, lane-dense (1, T) output.
    # dot_general contracts the last axes directly, so no (Hg, T) transpose of the
    # hidden-state slab is materialized in VMEM.
    z = hseq_ref[...]                                               # (T, Hg)
    y = lax.dot_general(wp_ref[...], z, (((1,), (1,)), ((), ())),
                        preferred_element_type=f32) + bp_ref[...]   # (1, T)
    y_ref[...] = jnp.maximum(y, 0.0)


# -----------------------------------------------------------------------------
# Wrapper-side parameter preparation (transpose + packed-gate lane padding).
# Done ONCE outside the kernel; parameters are static.
# -----------------------------------------------------------------------------
def _round_up(n, m):
    return ((n + m - 1) // m) * m


def _prep_gate_weight(w, H, Hg, Dp):
    """PyTorch LSTM weight (4H, D) -> transposed, per-gate padded (Dp, 4Hg).
       Gate order (i, f, g, o) is preserved; padding is only to the 32-lane
       granularity, not to 128 per gate."""
    D = w.shape[1]
    blocks = [jnp.pad(w[k * H:(k + 1) * H].T, ((0, Dp - D), (0, Hg - H)))
              for k in range(4)]
    return jnp.concatenate(blocks, axis=1).astype(jnp.float32)       # (Dp, 4Hg)


def _prep_gate_bias(bih, bhh, H, Hg):
    b = bih + bhh
    blocks = [jnp.pad(b[k * H:(k + 1) * H], (0, Hg - H)) for k in range(4)]
    return jnp.concatenate(blocks).reshape(1, 4 * Hg).astype(jnp.float32)


def prepare_params(params):
    """Takes raw PyTorch-layout params, returns kernel-ready (packed) params."""
    (we, be,
     wih0, whh0, bih0, bhh0,
     wih1, whh1, bih1, bhh1,
     wih2, whh2, bih2, bhh2,
     wp, bp) = params

    E, _In = we.shape
    H = whh0.shape[1]
    Ep = _round_up(E, 8)
    # Packed gate width: Hg is rounded only to the 32-lane granularity so 4*Hg is a
    # multiple of 128.  For the demo H=32 all four gates share a single 128-lane vreg
    # (no 4x per-gate inflation to 512 lanes).
    Hg = _round_up(H, 32)

    we_t = jnp.pad(we.T, ((0, 0), (0, Ep - E))).astype(jnp.float32)      # (In, Ep)
    be_p = jnp.pad(be, (0, Ep - E)).reshape(1, Ep).astype(jnp.float32)

    wih0_t = _prep_gate_weight(wih0, H, Hg, Ep)                          # (Ep, 4Hg)
    whh0_t = _prep_gate_weight(whh0, H, Hg, Hg)                          # (Hg, 4Hg)
    b0_p = _prep_gate_bias(bih0, bhh0, H, Hg)
    wih1_t = _prep_gate_weight(wih1, H, Hg, Hg)
    whh1_t = _prep_gate_weight(whh1, H, Hg, Hg)
    b1_p = _prep_gate_bias(bih1, bhh1, H, Hg)
    wih2_t = _prep_gate_weight(wih2, H, Hg, Hg)
    whh2_t = _prep_gate_weight(whh2, H, Hg, Hg)
    b2_p = _prep_gate_bias(bih2, bhh2, H, Hg)

    wp_p = jnp.pad(wp, ((0, 0), (0, Hg - H))).astype(jnp.float32)        # (1, Hg)
    bp_p = bp.reshape(1, 1).astype(jnp.float32)

    return (we_t, be_p,
            wih0_t, whh0_t, b0_p,
            wih1_t, whh1_t, b1_p,
            wih2_t, whh2_t, b2_p,
            wp_p, bp_p)


def _pick_vmem_limit(resident_bytes):
    """At least 32 MiB (safe on every generation); raised toward the chip's VMEM
    capacity when the whole-sequence slabs need it (v5e/v6e have 128 MiB)."""
    want = 2 * resident_bytes + (8 << 20)
    try:
        cap = int(pltpu.get_tpu_info().vmem_capacity_bytes)
    except Exception:
        cap = 64 << 20            # v7x-safe fallback
    return int(max(32 << 20, min(want, int(cap * 0.85))))


def lstm_model_forward(x, prepped_params):
    """x: (1, T, input_size) float32.  Returns y: (1, T) float32."""
    assert x.shape[0] == 1, "Only one example can be processed at once"
    T = x.shape[1]

    (we_t, be_p,
     wih0_t, whh0_t, b0_p,
     wih1_t, whh1_t, b1_p,
     wih2_t, whh2_t, b2_p,
     wp_p, bp_p) = prepped_params
    Hg = whh0_t.shape[0]

    unroll = True if (T + 2) <= 40 else 8
    kernel = functools.partial(_lstm_model_kernel, unroll=unroll)

    inputs = [
        x[0].astype(jnp.float32),                 # (T, In)
        we_t, be_p,                               # root_map conv (pre-transposed)
        wih0_t, whh0_t, b0_p,                     # LSTM layer 0
        wih1_t, whh1_t, b1_p,                     # LSTM layer 1
        wih2_t, whh2_t, b2_p,                     # LSTM layer 2
        wp_p, bp_p,                               # predictor conv
    ]

    resident_bytes = (4 * (T * 4 * Hg + T * Hg + T)
                      + sum(int(a.size) * 4 for a in inputs))

    vspec = pl.BlockSpec(memory_space=pltpu.MemorySpace.VMEM)
    y = pl.pallas_call(
        kernel,
        out_shape=jax.ShapeDtypeStruct((1, T), jnp.float32),
        in_specs=[vspec] * len(inputs),
        out_specs=vspec,
        scratch_shapes=[
            pltpu.VMEM((T, 4 * Hg), jnp.float32),   # layer-0 hoisted input projection
            pltpu.VMEM((T, Hg), jnp.float32),       # layer-2 hidden-state sequence
        ],
        compiler_params=pltpu.CompilerParams(
            vmem_limit_bytes=_pick_vmem_limit(resident_bytes)),
    )(*inputs)
    return y


# -----------------------------------------------------------------------------
# Pure-JAX reference (mirrors the PyTorch module exactly) + parameter init.
# -----------------------------------------------------------------------------
def lstm_model_reference(x, params):
    (we, be,
     wih0, whh0, bih0, bhh0,
     wih1, whh1, bih1, bhh1,
     wih2, whh2, bih2, bhh2,
     wp, bp) = params

    hi = lax.Precision.HIGHEST
    v = jnp.matmul(x[0], we.T, precision=hi) + be           # (T, E)

    def layer(inp, wih, whh, bih, bhh):
        H = whh.shape[1]

        def step(carry, x_t):
            h, c = carry
            gates = (jnp.matmul(x_t, wih.T, precision=hi) + bih + bhh
                     + jnp.matmul(h, whh.T, precision=hi))
            i = jax.nn.sigmoid(gates[0:H])
            f = jax.nn.sigmoid(gates[H:2 * H])
            g = jnp.tanh(gates[2 * H:3 * H])
            o = jax.nn.sigmoid(gates[3 * H:4 * H])
            c = f * c + i * g
            h = o * jnp.tanh(c)
            return (h, c), h

        init = (jnp.zeros((H,), jnp.float32), jnp.zeros((H,), jnp.float32))
        _, hs = lax.scan(step, init, inp)
        return hs

    z = layer(v, wih0, whh0, bih0, bhh0)
    z = layer(z, wih1, whh1, bih1, bhh1)
    z = layer(z, wih2, whh2, bih2, bhh2)
    y = jnp.matmul(z, wp.T, precision=hi) + bp               # (T, 1)
    return jnp.maximum(y, 0.0).T                             # (1, T)


def init_params(key, input_size, embedding_size, hidden_size):
    """Deterministic parameter init mirroring the PyTorch module's shapes."""
    keys = jax.random.split(key, 16)
    k = iter(keys)

    def unif(key, shape, bound):
        return jax.random.uniform(key, shape, jnp.float32, -bound, bound)

    cb = 1.0 / jnp.sqrt(input_size)
    we = unif(next(k), (embedding_size, input_size), cb)
    be = unif(next(k), (embedding_size,), cb)

    hb = 1.0 / jnp.sqrt(hidden_size)
    wih0 = unif(next(k), (4 * hidden_size, embedding_size), hb)
    whh0 = unif(next(k), (4 * hidden_size, hidden_size), hb)
    bih0 = unif(next(k), (4 * hidden_size,), hb)
    bhh0 = unif(next(k), (4 * hidden_size,), hb)
    wih1 = unif(next(k), (4 * hidden_size, hidden_size), hb)
    whh1 = unif(next(k), (4 * hidden_size, hidden_size), hb)
    bih1 = unif(next(k), (4 * hidden_size,), hb)
    bhh1 = unif(next(k), (4 * hidden_size,), hb)
    wih2 = unif(next(k), (4 * hidden_size, hidden_size), hb)
    whh2 = unif(next(k), (4 * hidden_size, hidden_size), hb)
    bih2 = unif(next(k), (4 * hidden_size,), hb)
    bhh2 = unif(next(k), (4 * hidden_size,), hb)

    pb = 1.0 / jnp.sqrt(hidden_size)
    wp = unif(next(k), (1, hidden_size), pb)
    bp = unif(next(k), (1,), pb)

    return (we, be,
            wih0, whh0, bih0, bhh0,
            wih1, whh1, bih1, bhh1,
            wih2, whh2, bih2, bhh2,
            wp, bp)


if __name__ == "__main__":
    input_size = 4
    embedding_size = 32
    hidden_size = 32
    seq_len = 8

    key = jax.random.PRNGKey(0)
    pkey, xkey = jax.random.split(key)
    params = init_params(pkey, input_size, embedding_size, hidden_size)
    x = jax.random.normal(xkey, (1, seq_len, input_size), jnp.float32)

    prepped = prepare_params(params)          # one-time weight prep (static params)
    y = lstm_model_forward(x, prepped)
    y = jax.block_until_ready(y)

    assert y.shape == (1, seq_len)
    assert bool(jnp.all(jnp.isfinite(y)))
    assert bool(jnp.all(y >= 0.0))            # ReLU output

    # Correctness vs. pure-JAX reference of the PyTorch forward pass.
    # All-f32 path: expected error ~1e-5; 1e-3 leaves margin for transcendental /
    # matmul-precision differences while still catching any layout regression.
    y_ref = lstm_model_reference(x, params)
    err = float(jnp.max(jnp.abs(y - y_ref)))
    assert err < 1e-3, f"max abs error vs reference too large: {err}"

    print("KERNEL_OK")
</pallas_src>

<mosaic_0001>
module attributes {stable_mosaic.version = 11 : i64} {
  func.func @_lstm_model_kernel(%arg0: memref<8x4xf32, #tpu.memory_space<vmem>>, %arg1: memref<4x32xf32, #tpu.memory_space<vmem>>, %arg2: memref<1x32xf32, #tpu.memory_space<vmem>>, %arg3: memref<32x128xf32, #tpu.memory_space<vmem>>, %arg4: memref<32x128xf32, #tpu.memory_space<vmem>>, %arg5: memref<1x128xf32, #tpu.memory_space<vmem>>, %arg6: memref<32x128xf32, #tpu.memory_space<vmem>>, %arg7: memref<32x128xf32, #tpu.memory_space<vmem>>, %arg8: memref<1x128xf32, #tpu.memory_space<vmem>>, %arg9: memref<32x128xf32, #tpu.memory_space<vmem>>, %arg10: memref<32x128xf32, #tpu.memory_space<vmem>>, %arg11: memref<1x128xf32, #tpu.memory_space<vmem>>, %arg12: memref<1x32xf32, #tpu.memory_space<vmem>>, %arg13: memref<1x1xf32, #tpu.memory_space<vmem>>, %arg14: memref<1x8xf32, #tpu.memory_space<vmem>>, %arg15: memref<8x128xf32, #tpu.memory_space<vmem>>, %arg16: memref<8x32xf32, #tpu.memory_space<vmem>>) attributes {dimension_semantics = [], scalar_prefetch = 0 : i64, scratch_operands = 2 : i64, tpu.core_type = #tpu.core_type<tc>} {
    %c0 = arith.constant 0 : index
    %c0_0 = arith.constant 0 : index
    %0 = vector.load %arg0[%c0, %c0_0] : memref<8x4xf32, #tpu.memory_space<vmem>>, vector<8x4xf32>
    %c0_1 = arith.constant 0 : index
    %c0_2 = arith.constant 0 : index
    %1 = vector.load %arg1[%c0_1, %c0_2] : memref<4x32xf32, #tpu.memory_space<vmem>>, vector<4x32xf32>
    %cst = arith.constant dense<0.000000e+00> : vector<8x32xf32>
    %2 = tpu.matmul %0, %1, %cst {dimension_numbers = #tpu.dot_dimension_numbers<[1], [0], [0], [1], [0, 0, 1, 1], [], []>} : vector<8x4xf32>, vector<4x32xf32>, vector<8x32xf32> -> vector<8x32xf32>
    %c0_3 = arith.constant 0 : index
    %c0_4 = arith.constant 0 : index
    %3 = vector.load %arg2[%c0_3, %c0_4] : memref<1x32xf32, #tpu.memory_space<vmem>>, vector<1x32xf32>
    %4 = vector.broadcast %3 : vector<1x32xf32> to vector<8x32xf32>
    %5 = arith.addf %2, %4 : vector<8x32xf32>
    %c0_5 = arith.constant 0 : index
    %c0_6 = arith.constant 0 : index
    %6 = vector.load %arg3[%c0_5, %c0_6] : memref<32x128xf32, #tpu.memory_space<vmem>>, vector<32x128xf32>
    %cst_7 = arith.constant dense<0.000000e+00> : vector<8x128xf32>
    %7 = tpu.matmul %5, %6, %cst_7 {dimension_numbers = #tpu.dot_dimension_numbers<[1], [0], [0], [1], [0, 0, 1, 1], [], []>} : vector<8x32xf32>, vector<32x128xf32>, vector<8x128xf32> -> vector<8x128xf32>
    %c0_8 = arith.constant 0 : index
    %c0_9 = arith.constant 0 : index
    %8 = vector.load %arg5[%c0_8, %c0_9] : memref<1x128xf32, #tpu.memory_space<vmem>>, vector<1x128xf32>
    %9 = vector.broadcast %8 : vector<1x128xf32> to vector<8x128xf32>
    %10 = arith.addf %7, %9 : vector<8x128xf32>
    %c0_10 = arith.constant 0 : index
    %c0_11 = arith.constant 0 : index
    %11 = vector.load %arg15[%c0_10, %c0_11] : memref<8x128xf32, #tpu.memory_space<vmem>>, vector<8x128xf32>
    tpu.vector_store %arg15[%c0_10, %c0_11], %10 {strides = array<i32>} : memref<8x128xf32, #tpu.memory_space<vmem>>, vector<8x128xf32>,
    %c0_12 = arith.constant 0 : index
    %c0_13 = arith.constant 0 : index
    %12 = vector.load %arg4[%c0_12, %c0_13] : memref<32x128xf32, #tpu.memory_space<vmem>>, vector<32x128xf32>
    %c0_14 = arith.constant 0 : index
    %c0_15 = arith.constant 0 : index
    %13 = vector.load %arg6[%c0_14, %c0_15] : memref<32x128xf32, #tpu.memory_space<vmem>>, vector<32x128xf32>
    %c0_16 = arith.constant 0 : index
    %c0_17 = arith.constant 0 : index
    %14 = vector.load %arg7[%c0_16, %c0_17] : memref<32x128xf32, #tpu.memory_space<vmem>>, vector<32x128xf32>
    %c0_18 = arith.constant 0 : index
    %c0_19 = arith.constant 0 : index
    %15 = vector.load %arg9[%c0_18, %c0_19] : memref<32x128xf32, #tpu.memory_space<vmem>>, vector<32x128xf32>
    %c0_20 = arith.constant 0 : index
    %c0_21 = arith.constant 0 : index
    %16 = vector.load %arg10[%c0_20, %c0_21] : memref<32x128xf32, #tpu.memory_space<vmem>>, vector<32x128xf32>
    %c0_22 = arith.constant 0 : index
    %c0_23 = arith.constant 0 : index
    %17 = vector.load %arg8[%c0_22, %c0_23] : memref<1x128xf32, #tpu.memory_space<vmem>>, vector<1x128xf32>
    %c0_24 = arith.constant 0 : index
    %c0_25 = arith.constant 0 : index
    %18 = vector.load %arg11[%c0_24, %c0_25] : memref<1x128xf32, #tpu.memory_space<vmem>>, vector<1x128xf32>
    %19 = tpu.iota {dimensions = array<i32: 1>} : vector<1x128xi32>
    %c64_i32 = arith.constant 64 : i32
    %20 = vector.broadcast %c64_i32 : i32 to vector<1x128xi32>
    %21 = arith.cmpi sge, %19, %20 : vector<1x128xi32>
    %c96_i32 = arith.constant 96 : i32
    %22 = vector.broadcast %c96_i32 : i32 to vector<1x128xi32>
    %23 = arith.cmpi slt, %19, %22 : vector<1x128xi32>
    %24 = arith.andi %21, %23 : vector<1x128xi1>
    %cst_26 = arith.constant 1.000000e+00 : f32
    %cst_27 = arith.constant 5.000000e-01 : f32
    %25 = vector.broadcast %cst_26 : f32 to vector<1x128xf32>
    %26 = vector.broadcast %cst_27 : f32 to vector<1x128xf32>
    %27 = arith.select %24, %25, %26 : vector<1x128xi1>, vector<1x128xf32>
    %cst_28 = arith.constant 0.000000e+00 : f32
    %cst_29 = arith.constant 5.000000e-01 : f32
    %28 = vector.broadcast %cst_28 : f32 to vector<1x128xf32>
    %29 = vector.broadcast %cst_29 : f32 to vector<1x128xf32>
    %30 = arith.select %24, %28, %29 : vector<1x128xi1>, vector<1x128xf32>
    %cst_30 = arith.constant 0.000000e+00 : f32
    %31 = vector.broadcast %cst_30 : f32 to vector<1x32xf32>
    %c0_i32 = arith.constant 0 : i32
    %c7_i32 = arith.constant 7 : i32
    %32 = arith.minsi %c0_i32, %c7_i32 : i32
    %33 = arith.index_cast %32 : i32 to index
    %c0_31 = arith.constant 0 : index
    %34 = vector.load %arg15[%33, %c0_31] : memref<8x128xf32, #tpu.memory_space<vmem>>, vector<1x128xf32>
    %cst_32 = arith.constant dense<0.000000e+00> : vector<1x128xf32>
    %35 = tpu.matmul %31, %12, %cst_32 {dimension_numbers = #tpu.dot_dimension_numbers<[1], [0], [0], [1], [0, 0, 1, 1], [], []>} : vector<1x32xf32>, vector<32x128xf32>, vector<1x128xf32> -> vector<1x128xf32>
    %36 = arith.addf %34, %35 : vector<1x128xf32>
    %cst_33 = arith.constant dense<0.000000e+00> : vector<1x128xf32>
    %37 = tpu.matmul %31, %13, %cst_33 {dimension_numbers = #tpu.dot_dimension_numbers<[1], [0], [0], [1], [0, 0, 1, 1], [], []>} : vector<1x32xf32>, vector<32x128xf32>, vector<1x128xf32> -> vector<1x128xf32>
    %cst_34 = arith.constant dense<0.000000e+00> : vector<1x128xf32>
    %38 = tpu.matmul %31, %14, %cst_34 {dimension_numbers = #tpu.dot_dimension_numbers<[1], [0], [0], [1], [0, 0, 1, 1], [], []>} : vector<1x32xf32>, vector<32x128xf32>, vector<1x128xf32> -> vector<1x128xf32>
    %39 = arith.addf %37, %38 : vector<1x128xf32>
    %40 = arith.addf %39, %17 : vector<1x128xf32>
    %cst_35 = arith.constant dense<0.000000e+00> : vector<1x128xf32>
    %41 = tpu.matmul %31, %15, %cst_35 {dimension_numbers = #tpu.dot_dimension_numbers<[1], [0], [0], [1], [0, 0, 1, 1], [], []>} : vector<1x32xf32>, vector<32x128xf32>, vector<1x128xf32> -> vector<1x128xf32>
    %cst_36 = arith.constant dense<0.000000e+00> : vector<1x128xf32>
    %42 = tpu.matmul %31, %16, %cst_36 {dimension_numbers = #tpu.dot_dimension_numbers<[1], [0], [0], [1], [0, 0, 1, 1], [], []>} : vector<1x32xf32>, vector<32x128xf32>, vector<1x128xf32> -> vector<1x128xf32>
    %43 = arith.addf %41, %42 : vector<1x128xf32>
    %44 = arith.addf %43, %18 : vector<1x128xf32>
    %45 = arith.mulf %36, %27 : vector<1x128xf32>
    %46 = math.tanh %45 : vector<1x128xf32>
    %47 = arith.mulf %46, %27 : vector<1x128xf32>
    %48 = arith.addf %47, %30 : vector<1x128xf32>
    %49 = vector.extract_strided_slice %48 {offsets = [0, 0], sizes = [1, 32], strides = [1, 1]} : vector<1x128xf32> to vector<1x32xf32>
    %50 = vector.extract_strided_slice %48 {offsets = [0, 32], sizes = [1, 32], strides = [1, 1]} : vector<1x128xf32> to vector<1x32xf32>
    %51 = vector.extract_strided_slice %48 {offsets = [0, 64], sizes = [1, 32], strides = [1, 1]} : vector<1x128xf32> to vector<1x32xf32>
    %52 = vector.extract_strided_slice %48 {offsets = [0, 96], sizes = [1, 32], strides = [1, 1]} : vector<1x128xf32> to vector<1x32xf32>
    %53 = arith.mulf %50, %31 : vector<1x32xf32>
    %54 = arith.mulf %49, %51 : vector<1x32xf32>
    %55 = arith.addf %53, %54 : vector<1x32xf32>
    %56 = math.tanh %55 : vector<1x32xf32>
    %57 = arith.mulf %52, %56 : vector<1x32xf32>
    %58 = arith.mulf %40, %27 : vector<1x128xf32>
    %59 = math.tanh %58 : vector<1x128xf32>
    %60 = arith.mulf %59, %27 : vector<1x128xf32>
    %61 = arith.addf %60, %30 : vector<1x128xf32>
    %62 = vector.extract_strided_slice %61 {offsets = [0, 0], sizes = [1, 32], strides = [1, 1]} : vector<1x128xf32> to vector<1x32xf32>
    %63 = vector.extract_strided_slice %61 {offsets = [0, 32], sizes = [1, 32], strides = [1, 1]} : vector<1x128xf32> to vector<1x32xf32>
    %64 = vector.extract_strided_slice %61 {offsets = [0, 64], sizes = [1, 32], strides = [1, 1]} : vector<1x128xf32> to vector<1x32xf32>
    %65 = vector.extract_strided_slice %61 {offsets = [0, 96], sizes = [1, 32], strides = [1, 1]} : vector<1x128xf32> to vector<1x32xf32>
    %66 = arith.mulf %63, %31 : vector<1x32xf32>
    %67 = arith.mulf %62, %64 : vector<1x32xf32>
    %68 = arith.addf %66, %67 : vector<1x32xf32>
    %69 = math.tanh %68 : vector<1x32xf32>
    %70 = arith.mulf %65, %69 : vector<1x32xf32>
    %71 = arith.mulf %44, %27 : vector<1x128xf32>
    %72 = math.tanh %71 : vector<1x128xf32>
    %73 = arith.mulf %72, %27 : vector<1x128xf32>
    %74 = arith.addf %73, %30 : vector<1x128xf32>
    %75 = vector.extract_strided_slice %74 {offsets = [0, 0], sizes = [1, 32], strides = [1, 1]} : vector<1x128xf32> to vector<1x32xf32>
    %76 = vector.extract_strided_slice %74 {offsets = [0, 32], sizes = [1, 32], strides = [1, 1]} : vector<1x128xf32> to vector<1x32xf32>
    %77 = vector.extract_strided_slice %74 {offsets = [0, 64], sizes = [1, 32], strides = [1, 1]} : vector<1x128xf32> to vector<1x32xf32>
    %78 = vector.extract_strided_slice %74 {offsets = [0, 96], sizes = [1, 32], strides = [1, 1]} : vector<1x128xf32> to vector<1x32xf32>
    %79 = arith.mulf %76, %31 : vector<1x32xf32>
    %80 = arith.mulf %75, %77 : vector<1x32xf32>
    %81 = arith.addf %79, %80 : vector<1x32xf32>
    %82 = math.tanh %81 : vector<1x32xf32>
    %83 = arith.mulf %78, %82 : vector<1x32xf32>
    %c2_i32 = arith.constant 2 : i32
    %84 = arith.subi %c0_i32, %c2_i32 : i32
    %c0_i32_37 = arith.constant 0 : i32
    %85 = arith.maxsi %84, %c0_i32_37 : i32
    %86 = arith.index_cast %85 : i32 to index
    %c0_38 = arith.constant 0 : index
    %87 = vector.load %arg16[%86, %c0_38] : memref<8x32xf32, #tpu.memory_space<vmem>>, vector<1x32xf32>
    tpu.vector_store %arg16[%86, %c0_38], %83 {strides = array<i32>} : memref<8x32xf32, #tpu.memory_space<vmem>>, vector<1x32xf32>,
    %c1_i32 = arith.constant 1 : i32
    %c7_i32_39 = arith.constant 7 : i32
    %88 = arith.minsi %c1_i32, %c7_i32_39 : i32
    %89 = arith.index_cast %88 : i32 to index
    %c0_40 = arith.constant 0 : index
    %90 = vector.load %arg15[%89, %c0_40] : memref<8x128xf32, #tpu.memory_space<vmem>>, vector<1x128xf32>
    %cst_41 = arith.constant dense<0.000000e+00> : vector<1x128xf32>
    %91 = tpu.matmul %57, %12, %cst_41 {dimension_numbers = #tpu.dot_dimension_numbers<[1], [0], [0], [1], [0, 0, 1, 1], [], []>} : vector<1x32xf32>, vector<32x128xf32>, vector<1x128xf32> -> vector<1x128xf32>
    %92 = arith.addf %90, %91 : vector<1x128xf32>
    %cst_42 = arith.constant dense<0.000000e+00> : vector<1x128xf32>
    %93 = tpu.matmul %57, %13, %cst_42 {dimension_numbers = #tpu.dot_dimension_numbers<[1], [0], [0], [1], [0, 0, 1, 1], [], []>} : vector<1x32xf32>, vector<32x128xf32>, vector<1x128xf32> -> vector<1x128xf32>
    %cst_43 = arith.constant dense<0.000000e+00> : vector<1x128xf32>
    %94 = tpu.matmul %70, %14, %cst_43 {dimension_numbers = #tpu.dot_dimension_numbers<[1], [0], [0], [1], [0, 0, 1, 1], [], []>} : vector<1x32xf32>, vector<32x128xf32>, vector<1x128xf32> -> vector<1x128xf32>
    %95 = arith.addf %93, %94 : vector<1x128xf32>
    %96 = arith.addf %95, %17 : vector<1x128xf32>
    %cst_44 = arith.constant dense<0.000000e+00> : vector<1x128xf32>
    %97 = tpu.matmul %70, %15, %cst_44 {dimension_numbers = #tpu.dot_dimension_numbers<[1], [0], [0], [1], [0, 0, 1, 1], [], []>} : vector<1x32xf32>, vector<32x128xf32>, vector<1x128xf32> -> vector<1x128xf32>
    %cst_45 = arith.constant dense<0.000000e+00> : vector<1x128xf32>
    %98 = tpu.matmul %83, %16, %cst_45 {dimension_numbers = #tpu.dot_dimension_numbers<[1], [0], [0], [1], [0, 0, 1, 1], [], []>} : vector<1x32xf32>, vector<32x128xf32>, vector<1x128xf32> -> vector<1x128xf32>
    %99 = arith.addf %97, %98 : vector<1x128xf32>
    %100 = arith.addf %99, %18 : vector<1x128xf32>
    %101 = arith.mulf %92, %27 : vector<1x128xf32>
    %102 = math.tanh %101 : vector<1x128xf32>
    %103 = arith.mulf %102, %27 : vector<1x128xf32>
    %104 = arith.addf %103, %30 : vector<1x128xf32>
    %105 = vector.extract_strided_slice %104 {offsets = [0, 0], sizes = [1, 32], strides = [1, 1]} : vector<1x128xf32> to vector<1x32xf32>
    %106 = vector.extract_strided_slice %104 {offsets = [0, 32], sizes = [1, 32], strides = [1, 1]} : vector<1x128xf32> to vector<1x32xf32>
    %107 = vector.extract_strided_slice %104 {offsets = [0, 64], sizes = [1, 32], strides = [1, 1]} : vector<1x128xf32> to vector<1x32xf32>
    %108 = vector.extract_strided_slice %104 {offsets = [0, 96], sizes = [1, 32], strides = [1, 1]} : vector<1x128xf32> to vector<1x32xf32>
    %109 = arith.mulf %106, %55 : vector<1x32xf32>
    %110 = arith.mulf %105, %107 : vector<1x32xf32>
    %111 = arith.addf %109, %110 : vector<1x32xf32>
    %112 = math.tanh %111 : vector<1x32xf32>
    %113 = arith.mulf %108, %112 : vector<1x32xf32>
    %114 = arith.mulf %96, %27 : vector<1x128xf32>
    %115 = math.tanh %114 : vector<1x128xf32>
    %116 = arith.mulf %115, %27 : vector<1x128xf32>
    %117 = arith.addf %116, %30 : vector<1x128xf32>
    %118 = vector.extract_strided_slice %117 {offsets = [0, 0], sizes = [1, 32], strides = [1, 1]} : vector<1x128xf32> to vector<1x32xf32>
    %119 = vector.extract_strided_slice %117 {offsets = [0, 32], sizes = [1, 32], strides = [1, 1]} : vector<1x128xf32> to vector<1x32xf32>
    %120 = vector.extract_strided_slice %117 {offsets = [0, 64], sizes = [1, 32], strides = [1, 1]} : vector<1x128xf32> to vector<1x32xf32>
    %121 = vector.extract_strided_slice %117 {offsets = [0, 96], sizes = [1, 32], strides = [1, 1]} : vector<1x128xf32> to vector<1x32xf32>
    %122 = arith.mulf %119, %68 : vector<1x32xf32>
    %123 = arith.mulf %118, %120 : vector<1x32xf32>
    %124 = arith.addf %122, %123 : vector<1x32xf32>
    %125 = math.tanh %124 : vector<1x32xf32>
    %126 = arith.mulf %121, %125 : vector<1x32xf32>
    %127 = arith.mulf %100, %27 : vector<1x128xf32>
    %128 = math.tanh %127 : vector<1x128xf32>
    %129 = arith.mulf %128, %27 : vector<1x128xf32>
    %130 = arith.addf %129, %30 : vector<1x128xf32>
    %131 = vector.extract_strided_slice %130 {offsets = [0, 0], sizes = [1, 32], strides = [1, 1]} : vector<1x128xf32> to vector<1x32xf32>
    %132 = vector.extract_strided_slice %130 {offsets = [0, 32], sizes = [1, 32], strides = [1, 1]} : vector<1x128xf32> to vector<1x32xf32>
    %133 = vector.extract_strided_slice %130 {offsets = [0, 64], sizes = [1, 32], strides = [1, 1]} : vector<1x128xf32> to vector<1x32xf32>
    %134 = vector.extract_strided_slice %130 {offsets = [0, 96], sizes = [1, 32], strides = [1, 1]} : vector<1x128xf32> to vector<1x32xf32>
    %135 = arith.mulf %132, %81 : vector<1x32xf32>
    %136 = arith.mulf %131, %133 : vector<1x32xf32>
    %137 = arith.addf %135, %136 : vector<1x32xf32>
    %138 = math.tanh %137 : vector<1x32xf32>
    %139 = arith.mulf %134, %138 : vector<1x32xf32>
    %c2_i32_46 = arith.constant 2 : i32
    %140 = arith.subi %c1_i32, %c2_i32_46 : i32
    %c0_i32_47 = arith.constant 0 : i32
    %141 = arith.maxsi %140, %c0_i32_47 : i32
    %142 = arith.index_cast %141 : i32 to index
    %c0_48 = arith.constant 0 : index
    %143 = vector.load %arg16[%142, %c0_48] : memref<8x32xf32, #tpu.memory_space<vmem>>, vector<1x32xf32>
    tpu.vector_store %arg16[%142, %c0_48], %139 {strides = array<i32>} : memref<8x32xf32, #tpu.memory_space<vmem>>, vector<1x32xf32>,
    %c2_i32_49 = arith.constant 2 : i32
    %c7_i32_50 = arith.constant 7 : i32
    %144 = arith.minsi %c2_i32_49, %c7_i32_50 : i32
    %145 = arith.index_cast %144 : i32 to index
    %c0_51 = arith.constant 0 : index
    %146 = vector.load %arg15[%145, %c0_51] : memref<8x128xf32, #tpu.memory_space<vmem>>, vector<1x128xf32>
    %cst_52 = arith.constant dense<0.000000e+00> : vector<1x128xf32>
    %147 = tpu.matmul %113, %12, %cst_52 {dimension_numbers = #tpu.dot_dimension_numbers<[1], [0], [0], [1], [0, 0, 1, 1], [], []>} : vector<1x32xf32>, vector<32x128xf32>, vector<1x128xf32> -> vector<1x128xf32>
    %148 = arith.addf %146, %147 : vector<1x128xf32>
    %cst_53 = arith.constant dense<0.000000e+00> : vector<1x128xf32>
    %149 = tpu.matmul %113, %13, %cst_53 {dimension_numbers = #tpu.dot_dimension_numbers<[1], [0], [0], [1], [0, 0, 1, 1], [], []>} : vector<1x32xf32>, vector<32x128xf32>, vector<1x128xf32> -> vector<1x128xf32>
    %cst_54 = arith.constant dense<0.000000e+00> : vector<1x128xf32>
    %150 = tpu.matmul %126, %14, %cst_54 {dimension_numbers = #tpu.dot_dimension_numbers<[1], [0], [0], [1], [0, 0, 1, 1], [], []>} : vector<1x32xf32>, vector<32x128xf32>, vector<1x128xf32> -> vector<1x128xf32>
    %151 = arith.addf %149, %150 : vector<1x128xf32>
    %152 = arith.addf %151, %17 : vector<1x128xf32>
    %cst_55 = arith.constant dense<0.000000e+00> : vector<1x128xf32>
    %153 = tpu.matmul %126, %15, %cst_55 {dimension_numbers = #tpu.dot_dimension_numbers<[1], [0], [0], [1], [0, 0, 1, 1], [], []>} : vector<1x32xf32>, vector<32x128xf32>, vector<1x128xf32> -> vector<1x128xf32>
    %cst_56 = arith.constant dense<0.000000e+00> : vector<1x128xf32>
    %154 = tpu.matmul %139, %16, %cst_56 {dimension_numbers = #tpu.dot_dimension_numbers<[1], [0], [0], [1], [0, 0, 1, 1], [], []>} : vector<1x32xf32>, vector<32x128xf32>, vector<1x128xf32> -> vector<1x128xf32>
    %155 = arith.addf %153, %154 : vector<1x128xf32>
    %156 = arith.addf %155, %18 : vector<1x128xf32>
    %157 = arith.mulf %148, %27 : vector<1x128xf32>
    %158 = math.tanh %157 : vector<1x128xf32>
    %159 = arith.mulf %158, %27 : vector<1x128xf32>
    %160 = arith.addf %159, %30 : vector<1x128xf32>
    %161 = vector.extract_strided_slice %160 {offsets = [0, 0], sizes = [1, 32], strides = [1, 1]} : vector<1x128xf32> to vector<1x32xf32>
    %162 = vector.extract_strided_slice %160 {offsets = [0, 32], sizes = [1, 32], strides = [1, 1]} : vector<1x128xf32> to vector<1x32xf32>
    %163 = vector.extract_strided_slice %160 {offsets = [0, 64], sizes = [1, 32], strides = [1, 1]} : vector<1x128xf32> to vector<1x32xf32>
    %164 = vector.extract_strided_slice %160 {offsets = [0, 96], sizes = [1, 32], strides = [1, 1]} : vector<1x128xf32> to vector<1x32xf32>
    %165 = arith.mulf %162, %111 : vector<1x32xf32>
    %166 = arith.mulf %161, %163 : vector<1x32xf32>
    %167 = arith.addf %165, %166 : vector<1x32xf32>
    %168 = math.tanh %167 : vector<1x32xf32>
    %169 = arith.mulf %164, %168 : vector<1x32xf32>
    %170 = arith.mulf %152, %27 : vector<1x128xf32>
    %171 = math.tanh %170 : vector<1x128xf32>
    %172 = arith.mulf %171, %27 : vector<1x128xf32>
    %173 = arith.addf %172, %30 : vector<1x128xf32>
    %174 = vector.extract_strided_slice %173 {offsets = [0, 0], sizes = [1, 32], strides = [1, 1]} : vector<1x128xf32> to vector<1x32xf32>
    %175 = vector.extract_strided_slice %173 {offsets = [0, 32], sizes = [1, 32], strides = [1, 1]} : vector<1x128xf32> to vector<1x32xf32>
    %176 = vector.extract_strided_slice %173 {offsets = [0, 64], sizes = [1, 32], strides = [1, 1]} : vector<1x128xf32> to vector<1x32xf32>
    %177 = vector.extract_strided_slice %173 {offsets = [0, 96], sizes = [1, 32], strides = [1, 1]} : vector<1x128xf32> to vector<1x32xf32>
    %178 = arith.mulf %175, %124 : vector<1x32xf32>
    %179 = arith.mulf %174, %176 : vector<1x32xf32>
    %180 = arith.addf %178, %179 : vector<1x32xf32>
    %181 = math.tanh %180 : vector<1x32xf32>
    %182 = arith.mulf %177, %181 : vector<1x32xf32>
    %183 = arith.mulf %156, %27 : vector<1x128xf32>
    %184 = math.tanh %183 : vector<1x128xf32>
    %185 = arith.mulf %184, %27 : vector<1x128xf32>
    %186 = arith.addf %185, %30 : vector<1x128xf32>
    %187 = vector.extract_strided_slice %186 {offsets = [0, 0], sizes = [1, 32], strides = [1, 1]} : vector<1x128xf32> to vector<1x32xf32>
    %188 = vector.extract_strided_slice %186 {offsets = [0, 32], sizes = [1, 32], strides = [1, 1]} : vector<1x128xf32> to vector<1x32xf32>
    %189 = vector.extract_strided_slice %186 {offsets = [0, 64], sizes = [1, 32], strides = [1, 1]} : vector<1x128xf32> to vector<1x32xf32>
    %190 = vector.extract_strided_slice %186 {offsets = [0, 96], sizes = [1, 32], strides = [1, 1]} : vector<1x128xf32> to vector<1x32xf32>
    %191 = arith.mulf %188, %137 : vector<1x32xf32>
    %192 = arith.mulf %187, %189 : vector<1x32xf32>
    %193 = arith.addf %191, %192 : vector<1x32xf32>
    %194 = math.tanh %193 : vector<1x32xf32>
    %195 = arith.mulf %190, %194 : vector<1x32xf32>
    %c2_i32_57 = arith.constant 2 : i32
    %196 = arith.subi %c2_i32_49, %c2_i32_57 : i32
    %c0_i32_58 = arith.constant 0 : i32
    %197 = arith.maxsi %196, %c0_i32_58 : i32
    %198 = arith.index_cast %197 : i32 to index
    %c0_59 = arith.constant 0 : index
    %199 = vector.load %arg16[%198, %c0_59] : memref<8x32xf32, #tpu.memory_space<vmem>>, vector<1x32xf32>
    tpu.vector_store %arg16[%198, %c0_59], %195 {strides = array<i32>} : memref<8x32xf32, #tpu.memory_space<vmem>>, vector<1x32xf32>,
    %c3_i32 = arith.constant 3 : i32
    %c7_i32_60 = arith.constant 7 : i32
    %200 = arith.minsi %c3_i32, %c7_i32_60 : i32
    %201 = arith.index_cast %200 : i32 to index
    %c0_61 = arith.constant 0 : index
    %202 = vector.load %arg15[%201, %c0_61] : memref<8x128xf32, #tpu.memory_space<vmem>>, vector<1x128xf32>
    %cst_62 = arith.constant dense<0.000000e+00> : vector<1x128xf32>
    %203 = tpu.matmul %169, %12, %cst_62 {dimension_numbers = #tpu.dot_dimension_numbers<[1], [0], [0], [1], [0, 0, 1, 1], [], []>} : vector<1x32xf32>, vector<32x128xf32>, vector<1x128xf32> -> vector<1x128xf32>
    %204 = arith.addf %202, %203 : vector<1x128xf32>
    %cst_63 = arith.constant dense<0.000000e+00> : vector<1x128xf32>
    %205 = tpu.matmul %169, %13, %cst_63 {dimension_numbers = #tpu.dot_dimension_numbers<[1], [0], [0], [1], [0, 0, 1, 1], [], []>} : vector<1x32xf32>, vector<32x128xf32>, vector<1x128xf32> -> vector<1x128xf32>
    %cst_64 = arith.constant dense<0.000000e+00> : vector<1x128xf32>
    %206 = tpu.matmul %182, %14, %cst_64 {dimension_numbers = #tpu.dot_dimension_numbers<[1], [0], [0], [1], [0, 0, 1, 1], [], []>} : vector<1x32xf32>, vector<32x128xf32>, vector<1x128xf32> -> vector<1x128xf32>
    %207 = arith.addf %205, %206 : vector<1x128xf32>
    %208 = arith.addf %207, %17 : vector<1x128xf32>
    %cst_65 = arith.constant dense<0.000000e+00> : vector<1x128xf32>
    %209 = tpu.matmul %182, %15, %cst_65 {dimension_numbers = #tpu.dot_dimension_numbers<[1], [0], [0], [1], [0, 0, 1, 1], [], []>} : vector<1x32xf32>, vector<32x128xf32>, vector<1x128xf32> -> vector<1x128xf32>
    %cst_66 = arith.constant dense<0.000000e+00> : vector<1x128xf32>
    %210 = tpu.matmul %195, %16, %cst_66 {dimension_numbers = #tpu.dot_dimension_numbers<[1], [0], [0], [1], [0, 0, 1, 1], [], []>} : vector<1x32xf32>, vector<32x128xf32>, vector<1x128xf32> -> vector<1x128xf32>
    %211 = arith.addf %209, %210 : vector<1x128xf32>
    %212 = arith.addf %211, %18 : vector<1x128xf32>
    %213 = arith.mulf %204, %27 : vector<1x128xf32>
    %214 = math.tanh %213 : vector<1x128xf32>
    %215 = arith.mulf %214, %27 : vector<1x128xf32>
    %216 = arith.addf %215, %30 : vector<1x128xf32>
    %217 = vector.extract_strided_slice %216 {offsets = [0, 0], sizes = [1, 32], strides = [1, 1]} : vector<1x128xf32> to vector<1x32xf32>
    %218 = vector.extract_strided_slice %216 {offsets = [0, 32], sizes = [1, 32], strides = [1, 1]} : vector<1x128xf32> to vector<1x32xf32>
    %219 = vector.extract_strided_slice %216 {offsets = [0, 64], sizes = [1, 32], strides = [1, 1]} : vector<1x128xf32> to vector<1x32xf32>
    %220 = vector.extract_strided_slice %216 {offsets = [0, 96], sizes = [1, 32], strides = [1, 1]} : vector<1x128xf32> to vector<1x32xf32>
    %221 = arith.mulf %218, %167 : vector<1x32xf32>
    %222 = arith.mulf %217, %219 : vector<1x32xf32>
    %223 = arith.addf %221, %222 : vector<1x32xf32>
    %224 = math.tanh %223 : vector<1x32xf32>
    %225 = arith.mulf %220, %224 : vector<1x32xf32>
    %226 = arith.mulf %208, %27 : vector<1x128xf32>
    %227 = math.tanh %226 : vector<1x128xf32>
    %228 = arith.mulf %227, %27 : vector<1x128xf32>
    %229 = arith.addf %228, %30 : vector<1x128xf32>
    %230 = vector.extract_strided_slice %229 {offsets = [0, 0], sizes = [1, 32], strides = [1, 1]} : vector<1x128xf32> to vector<1x32xf32>
    %231 = vector.extract_strided_slice %229 {offsets = [0, 32], sizes = [1, 32], strides = [1, 1]} : vector<1x128xf32> to vector<1x32xf32>
    %232 = vector.extract_strided_slice %229 {offsets = [0, 64], sizes = [1, 32], strides = [1, 1]} : vector<1x128xf32> to vector<1x32xf32>
    %233 = vector.extract_strided_slice %229 {offsets = [0, 96], sizes = [1, 32], strides = [1, 1]} : vector<1x128xf32> to vector<1x32xf32>
    %234 = arith.mulf %231, %180 : vector<1x32xf32>
    %235 = arith.mulf %230, %232 : vector<1x32xf32>
    %236 = arith.addf %234, %235 : vector<1x32xf32>
    %237 = math.tanh %236 : vector<1x32xf32>
    %238 = arith.mulf %233, %237 : vector<1x32xf32>
    %239 = arith.mulf %212, %27 : vector<1x128xf32>
    %240 = math.tanh %239 : vector<1x128xf32>
    %241 = arith.mulf %240, %27 : vector<1x128xf32>
    %242 = arith.addf %241, %30 : vector<1x128xf32>
    %243 = vector.extract_strided_slice %242 {offsets = [0, 0], sizes = [1, 32], strides = [1, 1]} : vector<1x128xf32> to vector<1x32xf32>
    %244 = vector.extract_strided_slice %242 {offsets = [0, 32], sizes = [1, 32], strides = [1, 1]} : vector<1x128xf32> to vector<1x32xf32>
    %245 = vector.extract_strided_slice %242 {offsets = [0, 64], sizes = [1, 32], strides = [1, 1]} : vector<1x128xf32> to vector<1x32xf32>
    %246 = vector.extract_strided_slice %242 {offsets = [0, 96], sizes = [1, 32], strides = [1, 1]} : vector<1x128xf32> to vector<1x32xf32>
    %247 = arith.mulf %244, %193 : vector<1x32xf32>
    %248 = arith.mulf %243, %245 : vector<1x32xf32>
    %249 = arith.addf %247, %248 : vector<1x32xf32>
    %250 = math.tanh %249 : vector<1x32xf32>
    %251 = arith.mulf %246, %250 : vector<1x32xf32>
    %c2_i32_67 = arith.constant 2 : i32
    %252 = arith.subi %c3_i32, %c2_i32_67 : i32
    %c0_i32_68 = arith.constant 0 : i32
    %253 = arith.maxsi %252, %c0_i32_68 : i32
    %254 = arith.index_cast %253 : i32 to index
    %c0_69 = arith.constant 0 : index
    %255 = vector.load %arg16[%254, %c0_69] : memref<8x32xf32, #tpu.memory_space<vmem>>, vector<1x32xf32>
    tpu.vector_store %arg16[%254, %c0_69], %251 {strides = array<i32>} : memref<8x32xf32, #tpu.memory_space<vmem>>, vector<1x32xf32>,
    %c4_i32 = arith.constant 4 : i32
    %c7_i32_70 = arith.constant 7 : i32
    %256 = arith.minsi %c4_i32, %c7_i32_70 : i32
    %257 = arith.index_cast %256 : i32 to index
    %c0_71 = arith.constant 0 : index
    %258 = vector.load %arg15[%257, %c0_71] : memref<8x128xf32, #tpu.memory_space<vmem>>, vector<1x128xf32>
    %cst_72 = arith.constant dense<0.000000e+00> : vector<1x128xf32>
    %259 = tpu.matmul %225, %12, %cst_72 {dimension_numbers = #tpu.dot_dimension_numbers<[1], [0], [0], [1], [0, 0, 1, 1], [], []>} : vector<1x32xf32>, vector<32x128xf32>, vector<1x128xf32> -> vector<1x128xf32>
    %260 = arith.addf %258, %259 : vector<1x128xf32>
    %cst_73 = arith.constant dense<0.000000e+00> : vector<1x128xf32>
    %261 = tpu.matmul %225, %13, %cst_73 {dimension_numbers = #tpu.dot_dimension_numbers<[1], [0], [0], [1], [0, 0, 1, 1], [], []>} : vector<1x32xf32>, vector<32x128xf32>, vector<1x128xf32> -> vector<1x128xf32>
    %cst_74 = arith.constant dense<0.000000e+00> : vector<1x128xf32>
    %262 = tpu.matmul %238, %14, %cst_74 {dimension_numbers = #tpu.dot_dimension_numbers<[1], [0], [0], [1], [0, 0, 1, 1], [], []>} : vector<1x32xf32>, vector<32x128xf32>, vector<1x128xf32> -> vector<1x128xf32>
    %263 = arith.addf %261, %262 : vector<1x128xf32>
    %264 = arith.addf %263, %17 : vector<1x128xf32>
    %cst_75 = arith.constant dense<0.000000e+00> : vector<1x128xf32>
    %265 = tpu.matmul %238, %15, %cst_75 {dimension_numbers = #tpu.dot_dimension_numbers<[1], [0], [0], [1], [0, 0, 1, 1], [], []>} : vector<1x32xf32>, vector<32x128xf32>, vector<1x128xf32> -> vector<1x128xf32>
    %cst_76 = arith.constant dense<0.000000e+00> : vector<1x128xf32>
    %266 = tpu.matmul %251, %16, %cst_76 {dimension_numbers = #tpu.dot_dimension_numbers<[1], [0], [0], [1], [0, 0, 1, 1], [], []>} : vector<1x32xf32>, vector<32x128xf32>, vector<1x128xf32> -> vector<1x128xf32>
    %267 = arith.addf %265, %266 : vector<1x128xf32>
    %268 = arith.addf %267, %18 : vector<1x128xf32>
    %269 = arith.mulf %260, %27 : vector<1x128xf32>
    %270 = math.tanh %269 : vector<1x128xf32>
    %271 = arith.mulf %270, %27 : vector<1x128xf32>
    %272 = arith.addf %271, %30 : vector<1x128xf32>
    %273 = vector.extract_strided_slice %272 {offsets = [0, 0], sizes = [1, 32], strides = [1, 1]} : vector<1x128xf32> to vector<1x32xf32>
    %274 = vector.extract_strided_slice %272 {offsets = [0, 32], sizes = [1, 32], strides = [1, 1]} : vector<1x128xf32> to vector<1x32xf32>
    %275 = vector.extract_strided_slice %272 {offsets = [0, 64], sizes = [1, 32], strides = [1, 1]} : vector<1x128xf32> to vector<1x32xf32>
    %276 = vector.extract_strided_slice %272 {offsets = [0, 96], sizes = [1, 32], strides = [1, 1]} : vector<1x128xf32> to vector<1x32xf32>
    %277 = arith.mulf %274, %223 : vector<1x32xf32>
    %278 = arith.mulf %273, %275 : vector<1x32xf32>
    %279 = arith.addf %277, %278 : vector<1x32xf32>
    %280 = math.tanh %279 : vector<1x32xf32>
    %281 = arith.mulf %276, %280 : vector<1x32xf32>
    %282 = arith.mulf %264, %27 : vector<1x128xf32>
    %283 = math.tanh %282 : vector<1x128xf32>
    %284 = arith.mulf %283, %27 : vector<1x128xf32>
    %285 = arith.addf %284, %30 : vector<1x128xf32>
    %286 = vector.extract_strided_slice %285 {offsets = [0, 0], sizes = [1, 32], strides = [1, 1]} : vector<1x128xf32> to vector<1x32xf32>
    %287 = vector.extract_strided_slice %285 {offsets = [0, 32], sizes = [1, 32], strides = [1, 1]} : vector<1x128xf32> to vector<1x32xf32>
    %288 = vector.extract_strided_slice %285 {offsets = [0, 64], sizes = [1, 32], strides = [1, 1]} : vector<1x128xf32> to vector<1x32xf32>
    %289 = vector.extract_strided_slice %285 {offsets = [0, 96], sizes = [1, 32], strides = [1, 1]} : vector<1x128xf32> to vector<1x32xf32>
    %290 = arith.mulf %287, %236 : vector<1x32xf32>
    %291 = arith.mulf %286, %288 : vector<1x32xf32>
    %292 = arith.addf %290, %291 : vector<1x32xf32>
    %293 = math.tanh %292 : vector<1x32xf32>
    %294 = arith.mulf %289, %293 : vector<1x32xf32>
    %295 = arith.mulf %268, %27 : vector<1x128xf32>
    %296 = math.tanh %295 : vector<1x128xf32>
    %297 = arith.mulf %296, %27 : vector<1x128xf32>
    %298 = arith.addf %297, %30 : vector<1x128xf32>
    %299 = vector.extract_strided_slice %298 {offsets = [0, 0], sizes = [1, 32], strides = [1, 1]} : vector<1x128xf32> to vector<1x32xf32>
    %300 = vector.extract_strided_slice %298 {offsets = [0, 32], sizes = [1, 32], strides = [1, 1]} : vector<1x128xf32> to vector<1x32xf32>
    %301 = vector.extract_strided_slice %298 {offsets = [0, 64], sizes = [1, 32], strides = [1, 1]} : vector<1x128xf32> to vector<1x32xf32>
    %302 = vector.extract_strided_slice %298 {offsets = [0, 96], sizes = [1, 32], strides = [1, 1]} : vector<1x128xf32> to vector<1x32xf32>
    %303 = arith.mulf %300, %249 : vector<1x32xf32>
    %304 = arith.mulf %299, %301 : vector<1x32xf32>
    %305 = arith.addf %303, %304 : vector<1x32xf32>
    %306 = math.tanh %305 : vector<1x32xf32>
    %307 = arith.mulf %302, %306 : vector<1x32xf32>
    %c2_i32_77 = arith.constant 2 : i32
    %308 = arith.subi %c4_i32, %c2_i32_77 : i32
    %c0_i32_78 = arith.constant 0 : i32
    %309 = arith.maxsi %308, %c0_i32_78 : i32
    %310 = arith.index_cast %309 : i32 to index
    %c0_79 = arith.constant 0 : index
    %311 = vector.load %arg16[%310, %c0_79] : memref<8x32xf32, #tpu.memory_space<vmem>>, vector<1x32xf32>
    tpu.vector_store %arg16[%310, %c0_79], %307 {strides = array<i32>} : memref<8x32xf32, #tpu.memory_space<vmem>>, vector<1x32xf32>,
    %c5_i32 = arith.constant 5 : i32
    %c7_i32_80 = arith.constant 7 : i32
    %312 = arith.minsi %c5_i32, %c7_i32_80 : i32
    %313 = arith.index_cast %312 : i32 to index
    %c0_81 = arith.constant 0 : index
    %314 = vector.load %arg15[%313, %c0_81] : memref<8x128xf32, #tpu.memory_space<vmem>>, vector<1x128xf32>
    %cst_82 = arith.constant dense<0.000000e+00> : vector<1x128xf32>
    %315 = tpu.matmul %281, %12, %cst_82 {dimension_numbers = #tpu.dot_dimension_numbers<[1], [0], [0], [1], [0, 0, 1, 1], [], []>} : vector<1x32xf32>, vector<32x128xf32>, vector<1x128xf32> -> vector<1x128xf32>
    %316 = arith.addf %314, %315 : vector<1x128xf32>
    %cst_83 = arith.constant dense<0.000000e+00> : vector<1x128xf32>
    %317 = tpu.matmul %281, %13, %cst_83 {dimension_numbers = #tpu.dot_dimension_numbers<[1], [0], [0], [1], [0, 0, 1, 1], [], []>} : vector<1x32xf32>, vector<32x128xf32>, vector<1x128xf32> -> vector<1x128xf32>
    %cst_84 = arith.constant dense<0.000000e+00> : vector<1x128xf32>
    %318 = tpu.matmul %294, %14, %cst_84 {dimension_numbers = #tpu.dot_dimension_numbers<[1], [0], [0], [1], [0, 0, 1, 1], [], []>} : vector<1x32xf32>, vector<32x128xf32>, vector<1x128xf32> -> vector<1x128xf32>
    %319 = arith.addf %317, %318 : vector<1x128xf32>
    %320 = arith.addf %319, %17 : vector<1x128xf32>
    %cst_85 = arith.constant dense<0.000000e+00> : vector<1x128xf32>
    %321 = tpu.matmul %294, %15, %cst_85 {dimension_numbers = #tpu.dot_dimension_numbers<[1], [0], [0], [1], [0, 0, 1, 1], [], []>} : vector<1x32xf32>, vector<32x128xf32>, vector<1x128xf32> -> vector<1x128xf32>
    %cst_86 = arith.constant dense<0.000000e+00> : vector<1x128xf32>
    %322 = tpu.matmul %307, %16, %cst_86 {dimension_numbers = #tpu.dot_dimension_numbers<[1], [0], [0], [1], [0, 0, 1, 1], [], []>} : vector<1x32xf32>, vector<32x128xf32>, vector<1x128xf32> -> vector<1x128xf32>
    %323 = arith.addf %321, %322 : vector<1x128xf32>
    %324 = arith.addf %323, %18 : vector<1x128xf32>
    %325 = arith.mulf %316, %27 : vector<1x128xf32>
    %326 = math.tanh %325 : vector<1x128xf32>
    %327 = arith.mulf %326, %27 : vector<1x128xf32>
    %328 = arith.addf %327, %30 : vector<1x128xf32>
    %329 = vector.extract_strided_slice %328 {offsets = [0, 0], sizes = [1, 32], strides = [1, 1]} : vector<1x128xf32> to vector<1x32xf32>
    %330 = vector.extract_strided_slice %328 {offsets = [0, 32], sizes = [1, 32], strides = [1, 1]} : vector<1x128xf32> to vector<1x32xf32>
    %331 = vector.extract_strided_slice %328 {offsets = [0, 64], sizes = [1, 32], strides = [1, 1]} : vector<1x128xf32> to vector<1x32xf32>
    %332 = vector.extract_strided_slice %328 {offsets = [0, 96], sizes = [1, 32], strides = [1, 1]} : vector<1x128xf32> to vector<1x32xf32>
    %333 = arith.mulf %330, %279 : vector<1x32xf32>
    %334 = arith.mulf %329, %331 : vector<1x32xf32>
    %335 = arith.addf %333, %334 : vector<1x32xf32>
    %336 = math.tanh %335 : vector<1x32xf32>
    %337 = arith.mulf %332, %336 : vector<1x32xf32>
    %338 = arith.mulf %320, %27 : vector<1x128xf32>
    %339 = math.tanh %338 : vector<1x128xf32>
    %340 = arith.mulf %339, %27 : vector<1x128xf32>
    %341 = arith.addf %340, %30 : vector<1x128xf32>
    %342 = vector.extract_strided_slice %341 {offsets = [0, 0], sizes = [1, 32], strides = [1, 1]} : vector<1x128xf32> to vector<1x32xf32>
    %343 = vector.extract_strided_slice %341 {offsets = [0, 32], sizes = [1, 32], strides = [1, 1]} : vector<1x128xf32> to vector<1x32xf32>
    %344 = vector.extract_strided_slice %341 {offsets = [0, 64], sizes = [1, 32], strides = [1, 1]} : vector<1x128xf32> to vector<1x32xf32>
    %345 = vector.extract_strided_slice %341 {offsets = [0, 96], sizes = [1, 32], strides = [1, 1]} : vector<1x128xf32> to vector<1x32xf32>
    %346 = arith.mulf %343, %292 : vector<1x32xf32>
    %347 = arith.mulf %342, %344 : vector<1x32xf32>
    %348 = arith.addf %346, %347 : vector<1x32xf32>
    %349 = math.tanh %348 : vector<1x32xf32>
    %350 = arith.mulf %345, %349 : vector<1x32xf32>
    %351 = arith.mulf %324, %27 : vector<1x128xf32>
    %352 = math.tanh %351 : vector<1x128xf32>
    %353 = arith.mulf %352, %27 : vector<1x128xf32>
    %354 = arith.addf %353, %30 : vector<1x128xf32>
    %355 = vector.extract_strided_slice %354 {offsets = [0, 0], sizes = [1, 32], strides = [1, 1]} : vector<1x128xf32> to vector<1x32xf32>
    %356 = vector.extract_strided_slice %354 {offsets = [0, 32], sizes = [1, 32], strides = [1, 1]} : vector<1x128xf32> to vector<1x32xf32>
    %357 = vector.extract_strided_slice %354 {offsets = [0, 64], sizes = [1, 32], strides = [1, 1]} : vector<1x128xf32> to vector<1x32xf32>
    %358 = vector.extract_strided_slice %354 {offsets = [0, 96], sizes = [1, 32], strides = [1, 1]} : vector<1x128xf32> to vector<1x32xf32>
    %359 = arith.mulf %356, %305 : vector<1x32xf32>
    %360 = arith.mulf %355, %357 : vector<1x32xf32>
    %361 = arith.addf %359, %360 : vector<1x32xf32>
    %362 = math.tanh %361 : vector<1x32xf32>
    %363 = arith.mulf %358, %362 : vector<1x32xf32>
    %c2_i32_87 = arith.constant 2 : i32
    %364 = arith.subi %c5_i32, %c2_i32_87 : i32
    %c0_i32_88 = arith.constant 0 : i32
    %365 = arith.maxsi %364, %c0_i32_88 : i32
    %366 = arith.index_cast %365 : i32 to index
    %c0_89 = arith.constant 0 : index
    %367 = vector.load %arg16[%366, %c0_89] : memref<8x32xf32, #tpu.memory_space<vmem>>, vector<1x32xf32>
    tpu.vector_store %arg16[%366, %c0_89], %363 {strides = array<i32>} : memref<8x32xf32, #tpu.memory_space<vmem>>, vector<1x32xf32>,
    %c6_i32 = arith.constant 6 : i32
    %c7_i32_90 = arith.constant 7 : i32
    %368 = arith.minsi %c6_i32, %c7_i32_90 : i32
    %369 = arith.index_cast %368 : i32 to index
    %c0_91 = arith.constant 0 : index
    %370 = vector.load %arg15[%369, %c0_91] : memref<8x128xf32, #tpu.memory_space<vmem>>, vector<1x128xf32>
    %cst_92 = arith.constant dense<0.000000e+00> : vector<1x128xf32>
    %371 = tpu.matmul %337, %12, %cst_92 {dimension_numbers = #tpu.dot_dimension_numbers<[1], [0], [0], [1], [0, 0, 1, 1], [], []>} : vector<1x32xf32>, vector<32x128xf32>, vector<1x128xf32> -> vector<1x128xf32>
    %372 = arith.addf %370, %371 : vector<1x128xf32>
    %cst_93 = arith.constant dense<0.000000e+00> : vector<1x128xf32>
    %373 = tpu.matmul %337, %13, %cst_93 {dimension_numbers = #tpu.dot_dimension_numbers<[1], [0], [0], [1], [0, 0, 1, 1], [], []>} : vector<1x32xf32>, vector<32x128xf32>, vector<1x128xf32> -> vector<1x128xf32>
    %cst_94 = arith.constant dense<0.000000e+00> : vector<1x128xf32>
    %374 = tpu.matmul %350, %14, %cst_94 {dimension_numbers = #tpu.dot_dimension_numbers<[1], [0], [0], [1], [0, 0, 1, 1], [], []>} : vector<1x32xf32>, vector<32x128xf32>, vector<1x128xf32> -> vector<1x128xf32>
    %375 = arith.addf %373, %374 : vector<1x128xf32>
    %376 = arith.addf %375, %17 : vector<1x128xf32>
    %cst_95 = arith.constant dense<0.000000e+00> : vector<1x128xf32>
    %377 = tpu.matmul %350, %15, %cst_95 {dimension_numbers = #tpu.dot_dimension_numbers<[1], [0], [0], [1], [0, 0, 1, 1], [], []>} : vector<1x32xf32>, vector<32x128xf32>, vector<1x128xf32> -> vector<1x128xf32>
    %cst_96 = arith.constant dense<0.000000e+00> : vector<1x128xf32>
    %378 = tpu.matmul %363, %16, %cst_96 {dimension_numbers = #tpu.dot_dimension_numbers<[1], [0], [0], [1], [0, 0, 1, 1], [], []>} : vector<1x32xf32>, vector<32x128xf32>, vector<1x128xf32> -> vector<1x128xf32>
    %379 = arith.addf %377, %378 : vector<1x128xf32>
    %380 = arith.addf %379, %18 : vector<1x128xf32>
    %381 = arith.mulf %372, %27 : vector<1x128xf32>
    %382 = math.tanh %381 : vector<1x128xf32>
    %383 = arith.mulf %382, %27 : vector<1x128xf32>
    %384 = arith.addf %383, %30 : vector<1x128xf32>
    %385 = vector.extract_strided_slice %384 {offsets = [0, 0], sizes = [1, 32], strides = [1, 1]} : vector<1x128xf32> to vector<1x32xf32>
    %386 = vector.extract_strided_slice %384 {offsets = [0, 32], sizes = [1, 32], strides = [1, 1]} : vector<1x128xf32> to vector<1x32xf32>
    %387 = vector.extract_strided_slice %384 {offsets = [0, 64], sizes = [1, 32], strides = [1, 1]} : vector<1x128xf32> to vector<1x32xf32>
    %388 = vector.extract_strided_slice %384 {offsets = [0, 96], sizes = [1, 32], strides = [1, 1]} : vector<1x128xf32> to vector<1x32xf32>
    %389 = arith.mulf %386, %335 : vector<1x32xf32>
    %390 = arith.mulf %385, %387 : vector<1x32xf32>
    %391 = arith.addf %389, %390 : vector<1x32xf32>
    %392 = math.tanh %391 : vector<1x32xf32>
    %393 = arith.mulf %388, %392 : vector<1x32xf32>
    %394 = arith.mulf %376, %27 : vector<1x128xf32>
    %395 = math.tanh %394 : vector<1x128xf32>
    %396 = arith.mulf %395, %27 : vector<1x128xf32>
    %397 = arith.addf %396, %30 : vector<1x128xf32>
    %398 = vector.extract_strided_slice %397 {offsets = [0, 0], sizes = [1, 32], strides = [1, 1]} : vector<1x128xf32> to vector<1x32xf32>
    %399 = vector.extract_strided_slice %397 {offsets = [0, 32], sizes = [1, 32], strides = [1, 1]} : vector<1x128xf32> to vector<1x32xf32>
    %400 = vector.extract_strided_slice %397 {offsets = [0, 64], sizes = [1, 32], strides = [1, 1]} : vector<1x128xf32> to vector<1x32xf32>
    %401 = vector.extract_strided_slice %397 {offsets = [0, 96], sizes = [1, 32], strides = [1, 1]} : vector<1x128xf32> to vector<1x32xf32>
    %402 = arith.mulf %399, %348 : vector<1x32xf32>
    %403 = arith.mulf %398, %400 : vector<1x32xf32>
    %404 = arith.addf %402, %403 : vector<1x32xf32>
    %405 = math.tanh %404 : vector<1x32xf32>
    %406 = arith.mulf %401, %405 : vector<1x32xf32>
    %407 = arith.mulf %380, %27 : vector<1x128xf32>
    %408 = math.tanh %407 : vector<1x128xf32>
    %409 = arith.mulf %408, %27 : vector<1x128xf32>
    %410 = arith.addf %409, %30 : vector<1x128xf32>
    %411 = vector.extract_strided_slice %410 {offsets = [0, 0], sizes = [1, 32], strides = [1, 1]} : vector<1x128xf32> to vector<1x32xf32>
    %412 = vector.extract_strided_slice %410 {offsets = [0, 32], sizes = [1, 32], strides = [1, 1]} : vector<1x128xf32> to vector<1x32xf32>
    %413 = vector.extract_strided_slice %410 {offsets = [0, 64], sizes = [1, 32], strides = [1, 1]} : vector<1x128xf32> to vector<1x32xf32>
    %414 = vector.extract_strided_slice %410 {offsets = [0, 96], sizes = [1, 32], strides = [1, 1]} : vector<1x128xf32> to vector<1x32xf32>
    %415 = arith.mulf %412, %361 : vector<1x32xf32>
    %416 = arith.mulf %411, %413 : vector<1x32xf32>
    %417 = arith.addf %415, %416 : vector<1x32xf32>
    %418 = math.tanh %417 : vector<1x32xf32>
    %419 = arith.mulf %414, %418 : vector<1x32xf32>
    %c2_i32_97 = arith.constant 2 : i32
    %420 = arith.subi %c6_i32, %c2_i32_97 : i32
    %c0_i32_98 = arith.constant 0 : i32
    %421 = arith.maxsi %420, %c0_i32_98 : i32
    %422 = arith.index_cast %421 : i32 to index
    %c0_99 = arith.constant 0 : index
    %423 = vector.load %arg16[%422, %c0_99] : memref<8x32xf32, #tpu.memory_space<vmem>>, vector<1x32xf32>
    tpu.vector_store %arg16[%422, %c0_99], %419 {strides = array<i32>} : memref<8x32xf32, #tpu.memory_space<vmem>>, vector<1x32xf32>,
    %c7_i32_100 = arith.constant 7 : i32
    %c7_i32_101 = arith.constant 7 : i32
    %424 = arith.minsi %c7_i32_100, %c7_i32_101 : i32
    %425 = arith.index_cast %424 : i32 to index
    %c0_102 = arith.constant 0 : index
    %426 = vector.load %arg15[%425, %c0_102] : memref<8x128xf32, #tpu.memory_space<vmem>>, vector<1x128xf32>
    %cst_103 = arith.constant dense<0.000000e+00> : vector<1x128xf32>
    %427 = tpu.matmul %393, %12, %cst_103 {dimension_numbers = #tpu.dot_dimension_numbers<[1], [0], [0], [1], [0, 0, 1, 1], [], []>} : vector<1x32xf32>, vector<32x128xf32>, vector<1x128xf32> -> vector<1x128xf32>
    %428 = arith.addf %426, %427 : vector<1x128xf32>
    %cst_104 = arith.constant dense<0.000000e+00> : vector<1x128xf32>
    %429 = tpu.matmul %393, %13, %cst_104 {dimension_numbers = #tpu.dot_dimension_numbers<[1], [0], [0], [1], [0, 0, 1, 1], [], []>} : vector<1x32xf32>, vector<32x128xf32>, vector<1x128xf32> -> vector<1x128xf32>
    %cst_105 = arith.constant dense<0.000000e+00> : vector<1x128xf32>
    %430 = tpu.matmul %406, %14, %cst_105 {dimension_numbers = #tpu.dot_dimension_numbers<[1], [0], [0], [1], [0, 0, 1, 1], [], []>} : vector<1x32xf32>, vector<32x128xf32>, vector<1x128xf32> -> vector<1x128xf32>
    %431 = arith.addf %429, %430 : vector<1x128xf32>
    %432 = arith.addf %431, %17 : vector<1x128xf32>
    %cst_106 = arith.constant dense<0.000000e+00> : vector<1x128xf32>
    %433 = tpu.matmul %406, %15, %cst_106 {dimension_numbers = #tpu.dot_dimension_numbers<[1], [0], [0], [1], [0, 0, 1, 1], [], []>} : vector<1x32xf32>, vector<32x128xf32>, vector<1x128xf32> -> vector<1x128xf32>
    %cst_107 = arith.constant dense<0.000000e+00> : vector<1x128xf32>
    %434 = tpu.matmul %419, %16, %cst_107 {dimension_numbers = #tpu.dot_dimension_numbers<[1], [0], [0], [1], [0, 0, 1, 1], [], []>} : vector<1x32xf32>, vector<32x128xf32>, vector<1x128xf32> -> vector<1x128xf32>
    %435 = arith.addf %433, %434 : vector<1x128xf32>
    %436 = arith.addf %435, %18 : vector<1x128xf32>
    %437 = arith.mulf %428, %27 : vector<1x128xf32>
    %438 = math.tanh %437 : vector<1x128xf32>
    %439 = arith.mulf %438, %27 : vector<1x128xf32>
    %440 = arith.addf %439, %30 : vector<1x128xf32>
    %441 = vector.extract_strided_slice %440 {offsets = [0, 0], sizes = [1, 32], strides = [1, 1]} : vector<1x128xf32> to vector<1x32xf32>
    %442 = vector.extract_strided_slice %440 {offsets = [0, 32], sizes = [1, 32], strides = [1, 1]} : vector<1x128xf32> to vector<1x32xf32>
    %443 = vector.extract_strided_slice %440 {offsets = [0, 64], sizes = [1, 32], strides = [1, 1]} : vector<1x128xf32> to vector<1x32xf32>
    %444 = vector.extract_strided_slice %440 {offsets = [0, 96], sizes = [1, 32], strides = [1, 1]} : vector<1x128xf32> to vector<1x32xf32>
    %445 = arith.mulf %442, %391 : vector<1x32xf32>
    %446 = arith.mulf %441, %443 : vector<1x32xf32>
    %447 = arith.addf %445, %446 : vector<1x32xf32>
    %448 = math.tanh %447 : vector<1x32xf32>
    %449 = arith.mulf %444, %448 : vector<1x32xf32>
    %450 = arith.mulf %432, %27 : vector<1x128xf32>
    %451 = math.tanh %450 : vector<1x128xf32>
    %452 = arith.mulf %451, %27 : vector<1x128xf32>
    %453 = arith.addf %452, %30 : vector<1x128xf32>
    %454 = vector.extract_strided_slice %453 {offsets = [0, 0], sizes = [1, 32], strides = [1, 1]} : vector<1x128xf32> to vector<1x32xf32>
    %455 = vector.extract_strided_slice %453 {offsets = [0, 32], sizes = [1, 32], strides = [1, 1]} : vector<1x128xf32> to vector<1x32xf32>
    %456 = vector.extract_strided_slice %453 {offsets = [0, 64], sizes = [1, 32], strides = [1, 1]} : vector<1x128xf32> to vector<1x32xf32>
    %457 = vector.extract_strided_slice %453 {offsets = [0, 96], sizes = [1, 32], strides = [1, 1]} : vector<1x128xf32> to vector<1x32xf32>
    %458 = arith.mulf %455, %404 : vector<1x32xf32>
    %459 = arith.mulf %454, %456 : vector<1x32xf32>
    %460 = arith.addf %458, %459 : vector<1x32xf32>
    %461 = math.tanh %460 : vector<1x32xf32>
    %462 = arith.mulf %457, %461 : vector<1x32xf32>
    %463 = arith.mulf %436, %27 : vector<1x128xf32>
    %464 = math.tanh %463 : vector<1x128xf32>
    %465 = arith.mulf %464, %27 : vector<1x128xf32>
    %466 = arith.addf %465, %30 : vector<1x128xf32>
    %467 = vector.extract_strided_slice %466 {offsets = [0, 0], sizes = [1, 32], strides = [1, 1]} : vector<1x128xf32> to vector<1x32xf32>
    %468 = vector.extract_strided_slice %466 {offsets = [0, 32], sizes = [1, 32], strides = [1, 1]} : vector<1x128xf32> to vector<1x32xf32>
    %469 = vector.extract_strided_slice %466 {offsets = [0, 64], sizes = [1, 32], strides = [1, 1]} : vector<1x128xf32> to vector<1x32xf32>
    %470 = vector.extract_strided_slice %466 {offsets = [0, 96], sizes = [1, 32], strides = [1, 1]} : vector<1x128xf32> to vector<1x32xf32>
    %471 = arith.mulf %468, %417 : vector<1x32xf32>
    %472 = arith.mulf %467, %469 : vector<1x32xf32>
    %473 = arith.addf %471, %472 : vector<1x32xf32>
    %474 = math.tanh %473 : vector<1x32xf32>
    %475 = arith.mulf %470, %474 : vector<1x32xf32>
    %c2_i32_108 = arith.constant 2 : i32
    %476 = arith.subi %c7_i32_100, %c2_i32_108 : i32
    %c0_i32_109 = arith.constant 0 : i32
    %477 = arith.maxsi %476, %c0_i32_109 : i32
    %478 = arith.index_cast %477 : i32 to index
    %c0_110 = arith.constant 0 : index
    %479 = vector.load %arg16[%478, %c0_110] : memref<8x32xf32, #tpu.memory_space<vmem>>, vector<1x32xf32>
    tpu.vector_store %arg16[%478, %c0_110], %475 {strides = array<i32>} : memref<8x32xf32, #tpu.memory_space<vmem>>, vector<1x32xf32>,
    %c8_i32 = arith.constant 8 : i32
    %c7_i32_111 = arith.constant 7 : i32
    %480 = arith.minsi %c8_i32, %c7_i32_111 : i32
    %481 = arith.index_cast %480 : i32 to index
    %c0_112 = arith.constant 0 : index
    %482 = vector.load %arg15[%481, %c0_112] : memref<8x128xf32, #tpu.memory_space<vmem>>, vector<1x128xf32>
    %cst_113 = arith.constant dense<0.000000e+00> : vector<1x128xf32>
    %483 = tpu.matmul %449, %12, %cst_113 {dimension_numbers = #tpu.dot_dimension_numbers<[1], [0], [0], [1], [0, 0, 1, 1], [], []>} : vector<1x32xf32>, vector<32x128xf32>, vector<1x128xf32> -> vector<1x128xf32>
    %484 = arith.addf %482, %483 : vector<1x128xf32>
    %cst_114 = arith.constant dense<0.000000e+00> : vector<1x128xf32>
    %485 = tpu.matmul %449, %13, %cst_114 {dimension_numbers = #tpu.dot_dimension_numbers<[1], [0], [0], [1], [0, 0, 1, 1], [], []>} : vector<1x32xf32>, vector<32x128xf32>, vector<1x128xf32> -> vector<1x128xf32>
    %cst_115 = arith.constant dense<0.000000e+00> : vector<1x128xf32>
    %486 = tpu.matmul %462, %14, %cst_115 {dimension_numbers = #tpu.dot_dimension_numbers<[1], [0], [0], [1], [0, 0, 1, 1], [], []>} : vector<1x32xf32>, vector<32x128xf32>, vector<1x128xf32> -> vector<1x128xf32>
    %487 = arith.addf %485, %486 : vector<1x128xf32>
    %488 = arith.addf %487, %17 : vector<1x128xf32>
    %cst_116 = arith.constant dense<0.000000e+00> : vector<1x128xf32>
    %489 = tpu.matmul %462, %15, %cst_116 {dimension_numbers = #tpu.dot_dimension_numbers<[1], [0], [0], [1], [0, 0, 1, 1], [], []>} : vector<1x32xf32>, vector<32x128xf32>, vector<1x128xf32> -> vector<1x128xf32>
    %cst_117 = arith.constant dense<0.000000e+00> : vector<1x128xf32>
    %490 = tpu.matmul %475, %16, %cst_117 {dimension_numbers = #tpu.dot_dimension_numbers<[1], [0], [0], [1], [0, 0, 1, 1], [], []>} : vector<1x32xf32>, vector<32x128xf32>, vector<1x128xf32> -> vector<1x128xf32>
    %491 = arith.addf %489, %490 : vector<1x128xf32>
    %492 = arith.addf %491, %18 : vector<1x128xf32>
    %493 = arith.mulf %484, %27 : vector<1x128xf32>
    %494 = math.tanh %493 : vector<1x128xf32>
    %495 = arith.mulf %494, %27 : vector<1x128xf32>
    %496 = arith.addf %495, %30 : vector<1x128xf32>
    %497 = vector.extract_strided_slice %496 {offsets = [0, 0], sizes = [1, 32], strides = [1, 1]} : vector<1x128xf32> to vector<1x32xf32>
    %498 = vector.extract_strided_slice %496 {offsets = [0, 32], sizes = [1, 32], strides = [1, 1]} : vector<1x128xf32> to vector<1x32xf32>
    %499 = vector.extract_strided_slice %496 {offsets = [0, 64], sizes = [1, 32], strides = [1, 1]} : vector<1x128xf32> to vector<1x32xf32>
    %500 = vector.extract_strided_slice %496 {offsets = [0, 96], sizes = [1, 32], strides = [1, 1]} : vector<1x128xf32> to vector<1x32xf32>
    %501 = arith.mulf %498, %447 : vector<1x32xf32>
    %502 = arith.mulf %497, %499 : vector<1x32xf32>
    %503 = arith.addf %501, %502 : vector<1x32xf32>
    %504 = math.tanh %503 : vector<1x32xf32>
    %505 = arith.mulf %500, %504 : vector<1x32xf32>
    %506 = arith.mulf %488, %27 : vector<1x128xf32>
    %507 = math.tanh %506 : vector<1x128xf32>
    %508 = arith.mulf %507, %27 : vector<1x128xf32>
    %509 = arith.addf %508, %30 : vector<1x128xf32>
    %510 = vector.extract_strided_slice %509 {offsets = [0, 0], sizes = [1, 32], strides = [1, 1]} : vector<1x128xf32> to vector<1x32xf32>
    %511 = vector.extract_strided_slice %509 {offsets = [0, 32], sizes = [1, 32], strides = [1, 1]} : vector<1x128xf32> to vector<1x32xf32>
    %512 = vector.extract_strided_slice %509 {offsets = [0, 64], sizes = [1, 32], strides = [1, 1]} : vector<1x128xf32> to vector<1x32xf32>
    %513 = vector.extract_strided_slice %509 {offsets = [0, 96], sizes = [1, 32], strides = [1, 1]} : vector<1x128xf32> to vector<1x32xf32>
    %514 = arith.mulf %511, %460 : vector<1x32xf32>
    %515 = arith.mulf %510, %512 : vector<1x32xf32>
    %516 = arith.addf %514, %515 : vector<1x32xf32>
    %517 = math.tanh %516 : vector<1x32xf32>
    %518 = arith.mulf %513, %517 : vector<1x32xf32>
    %519 = arith.mulf %492, %27 : vector<1x128xf32>
    %520 = math.tanh %519 : vector<1x128xf32>
    %521 = arith.mulf %520, %27 : vector<1x128xf32>
    %522 = arith.addf %521, %30 : vector<1x128xf32>
    %523 = vector.extract_strided_slice %522 {offsets = [0, 0], sizes = [1, 32], strides = [1, 1]} : vector<1x128xf32> to vector<1x32xf32>
    %524 = vector.extract_strided_slice %522 {offsets = [0, 32], sizes = [1, 32], strides = [1, 1]} : vector<1x128xf32> to vector<1x32xf32>
    %525 = vector.extract_strided_slice %522 {offsets = [0, 64], sizes = [1, 32], strides = [1, 1]} : vector<1x128xf32> to vector<1x32xf32>
    %526 = vector.extract_strided_slice %522 {offsets = [0, 96], sizes = [1, 32], strides = [1, 1]} : vector<1x128xf32> to vector<1x32xf32>
    %527 = arith.mulf %524, %473 : vector<1x32xf32>
    %528 = arith.mulf %523, %525 : vector<1x32xf32>
    %529 = arith.addf %527, %528 : vector<1x32xf32>
    %530 = math.tanh %529 : vector<1x32xf32>
    %531 = arith.mulf %526, %530 : vector<1x32xf32>
    %c2_i32_118 = arith.constant 2 : i32
    %532 = arith.subi %c8_i32, %c2_i32_118 : i32
    %c0_i32_119 = arith.constant 0 : i32
    %533 = arith.maxsi %532, %c0_i32_119 : i32
    %534 = arith.index_cast %533 : i32 to index
    %c0_120 = arith.constant 0 : index
    %535 = vector.load %arg16[%534, %c0_120] : memref<8x32xf32, #tpu.memory_space<vmem>>, vector<1x32xf32>
    tpu.vector_store %arg16[%534, %c0_120], %531 {strides = array<i32>} : memref<8x32xf32, #tpu.memory_space<vmem>>, vector<1x32xf32>,
    %c9_i32 = arith.constant 9 : i32
    %c7_i32_121 = arith.constant 7 : i32
    %536 = arith.minsi %c9_i32, %c7_i32_121 : i32
    %537 = arith.index_cast %536 : i32 to index
    %c0_122 = arith.constant 0 : index
    %538 = vector.load %arg15[%537, %c0_122] : memref<8x128xf32, #tpu.memory_space<vmem>>, vector<1x128xf32>
    %cst_123 = arith.constant dense<0.000000e+00> : vector<1x128xf32>
    %539 = tpu.matmul %505, %12, %cst_123 {dimension_numbers = #tpu.dot_dimension_numbers<[1], [0], [0], [1], [0, 0, 1, 1], [], []>} : vector<1x32xf32>, vector<32x128xf32>, vector<1x128xf32> -> vector<1x128xf32>
    %540 = arith.addf %538, %539 : vector<1x128xf32>
    %cst_124 = arith.constant dense<0.000000e+00> : vector<1x128xf32>
    %541 = tpu.matmul %505, %13, %cst_124 {dimension_numbers = #tpu.dot_dimension_numbers<[1], [0], [0], [1], [0, 0, 1, 1], [], []>} : vector<1x32xf32>, vector<32x128xf32>, vector<1x128xf32> -> vector<1x128xf32>
    %cst_125 = arith.constant dense<0.000000e+00> : vector<1x128xf32>
    %542 = tpu.matmul %518, %14, %cst_125 {dimension_numbers = #tpu.dot_dimension_numbers<[1], [0], [0], [1], [0, 0, 1, 1], [], []>} : vector<1x32xf32>, vector<32x128xf32>, vector<1x128xf32> -> vector<1x128xf32>
    %543 = arith.addf %541, %542 : vector<1x128xf32>
    %544 = arith.addf %543, %17 : vector<1x128xf32>
    %cst_126 = arith.constant dense<0.000000e+00> : vector<1x128xf32>
    %545 = tpu.matmul %518, %15, %cst_126 {dimension_numbers = #tpu.dot_dimension_numbers<[1], [0], [0], [1], [0, 0, 1, 1], [], []>} : vector<1x32xf32>, vector<32x128xf32>, vector<1x128xf32> -> vector<1x128xf32>
    %cst_127 = arith.constant dense<0.000000e+00> : vector<1x128xf32>
    %546 = tpu.matmul %531, %16, %cst_127 {dimension_numbers = #tpu.dot_dimension_numbers<[1], [0], [0], [1], [0, 0, 1, 1], [], []>} : vector<1x32xf32>, vector<32x128xf32>, vector<1x128xf32> -> vector<1x128xf32>
    %547 = arith.addf %545, %546 : vector<1x128xf32>
    %548 = arith.addf %547, %18 : vector<1x128xf32>
    %549 = arith.mulf %540, %27 : vector<1x128xf32>
    %550 = math.tanh %549 : vector<1x128xf32>
    %551 = arith.mulf %550, %27 : vector<1x128xf32>
    %552 = arith.addf %551, %30 : vector<1x128xf32>
    %553 = vector.extract_strided_slice %552 {offsets = [0, 0], sizes = [1, 32], strides = [1, 1]} : vector<1x128xf32> to vector<1x32xf32>
    %554 = vector.extract_strided_slice %552 {offsets = [0, 32], sizes = [1, 32], strides = [1, 1]} : vector<1x128xf32> to vector<1x32xf32>
    %555 = vector.extract_strided_slice %552 {offsets = [0, 64], sizes = [1, 32], strides = [1, 1]} : vector<1x128xf32> to vector<1x32xf32>
    %556 = vector.extract_strided_slice %552 {offsets = [0, 96], sizes = [1, 32], strides = [1, 1]} : vector<1x128xf32> to vector<1x32xf32>
    %557 = arith.mulf %554, %503 : vector<1x32xf32>
    %558 = arith.mulf %553, %555 : vector<1x32xf32>
    %559 = arith.addf %557, %558 : vector<1x32xf32>
    %560 = math.tanh %559 : vector<1x32xf32>
    %561 = arith.mulf %556, %560 : vector<1x32xf32>
    %562 = arith.mulf %544, %27 : vector<1x128xf32>
    %563 = math.tanh %562 : vector<1x128xf32>
    %564 = arith.mulf %563, %27 : vector<1x128xf32>
    %565 = arith.addf %564, %30 : vector<1x128xf32>
    %566 = vector.extract_strided_slice %565 {offsets = [0, 0], sizes = [1, 32], strides = [1, 1]} : vector<1x128xf32> to vector<1x32xf32>
    %567 = vector.extract_strided_slice %565 {offsets = [0, 32], sizes = [1, 32], strides = [1, 1]} : vector<1x128xf32> to vector<1x32xf32>
    %568 = vector.extract_strided_slice %565 {offsets = [0, 64], sizes = [1, 32], strides = [1, 1]} : vector<1x128xf32> to vector<1x32xf32>
    %569 = vector.extract_strided_slice %565 {offsets = [0, 96], sizes = [1, 32], strides = [1, 1]} : vector<1x128xf32> to vector<1x32xf32>
    %570 = arith.mulf %567, %516 : vector<1x32xf32>
    %571 = arith.mulf %566, %568 : vector<1x32xf32>
    %572 = arith.addf %570, %571 : vector<1x32xf32>
    %573 = math.tanh %572 : vector<1x32xf32>
    %574 = arith.mulf %569, %573 : vector<1x32xf32>
    %575 = arith.mulf %548, %27 : vector<1x128xf32>
    %576 = math.tanh %575 : vector<1x128xf32>
    %577 = arith.mulf %576, %27 : vector<1x128xf32>
    %578 = arith.addf %577, %30 : vector<1x128xf32>
    %579 = vector.extract_strided_slice %578 {offsets = [0, 0], sizes = [1, 32], strides = [1, 1]} : vector<1x128xf32> to vector<1x32xf32>
    %580 = vector.extract_strided_slice %578 {offsets = [0, 32], sizes = [1, 32], strides = [1, 1]} : vector<1x128xf32> to vector<1x32xf32>
    %581 = vector.extract_strided_slice %578 {offsets = [0, 64], sizes = [1, 32], strides = [1, 1]} : vector<1x128xf32> to vector<1x32xf32>
    %582 = vector.extract_strided_slice %578 {offsets = [0, 96], sizes = [1, 32], strides = [1, 1]} : vector<1x128xf32> to vector<1x32xf32>
    %583 = arith.mulf %580, %529 : vector<1x32xf32>
    %584 = arith.mulf %579, %581 : vector<1x32xf32>
    %585 = arith.addf %583, %584 : vector<1x32xf32>
    %586 = math.tanh %585 : vector<1x32xf32>
    %587 = arith.mulf %582, %586 : vector<1x32xf32>
    %c2_i32_128 = arith.constant 2 : i32
    %588 = arith.subi %c9_i32, %c2_i32_128 : i32
    %c0_i32_129 = arith.constant 0 : i32
    %589 = arith.maxsi %588, %c0_i32_129 : i32
    %590 = arith.index_cast %589 : i32 to index
    %c0_130 = arith.constant 0 : index
    %591 = vector.load %arg16[%590, %c0_130] : memref<8x32xf32, #tpu.memory_space<vmem>>, vector<1x32xf32>
    tpu.vector_store %arg16[%590, %c0_130], %587 {strides = array<i32>} : memref<8x32xf32, #tpu.memory_space<vmem>>, vector<1x32xf32>,
    %c10_i32 = arith.constant 10 : i32
    %c0_131 = arith.constant 0 : index
    %c0_132 = arith.constant 0 : index
    %592 = vector.load %arg16[%c0_131, %c0_132] : memref<8x32xf32, #tpu.memory_space<vmem>>, vector<8x32xf32>
    %c0_133 = arith.constant 0 : index
    %c0_134 = arith.constant 0 : index
    %593 = vector.load %arg12[%c0_133, %c0_134] : memref<1x32xf32, #tpu.memory_space<vmem>>, vector<1x32xf32>
    %cst_135 = arith.constant dense<0.000000e+00> : vector<1x8xf32>
    %594 = tpu.matmul %593, %592, %cst_135 {dimension_numbers = #tpu.dot_dimension_numbers<[1], [1], [0], [0], [0, 0, 1, 0], [], []>} : vector<1x32xf32>, vector<8x32xf32>, vector<1x8xf32> -> vector<1x8xf32>
    %c0_136 = arith.constant 0 : index
    %c0_137 = arith.constant 0 : index
    %595 = vector.load %arg13[%c0_136, %c0_137] : memref<1x1xf32, #tpu.memory_space<vmem>>, vector<1x1xf32>
    %596 = vector.broadcast %595 : vector<1x1xf32> to vector<1x8xf32>
    %597 = arith.addf %594, %596 : vector<1x8xf32>
    %cst_138 = arith.constant 0.000000e+00 : f32
    %598 = vector.broadcast %cst_138 : f32 to vector<1x8xf32>
    %599 = arith.maximumf %597, %598 : vector<1x8xf32>
    %c0_139 = arith.constant 0 : index
    %c0_140 = arith.constant 0 : index
    %600 = vector.load %arg14[%c0_139, %c0_140] : memref<1x8xf32, #tpu.memory_space<vmem>>, vector<1x8xf32>
    tpu.vector_store %arg14[%c0_139, %c0_140], %599 {strides = array<i32>} : memref<1x8xf32, #tpu.memory_space<vmem>>, vector<1x8xf32>,
    return
  }
}

</mosaic_0001>

<llo_original>
// kernel: tpu_custom_call.1
$region0: #{tpu_custom_call.1}
  #allocation0 [shape = 'u32[]', space=smem, size = 0x4, offset = 0x4, fixed_abs, tag = 'smem constant byte address 0x4 - core index']
  #allocation1 [shape = 'u32[72,128]{1,0:T(1,128)}', space=vmem, size = 0x9000, scoped, tag = 'internal scratch']
  #allocation2 [shape = 'f32[8,128]{1,0:T(8,128)}', space=vmem, size = 0x1000, scoped, tag = 'scratch operand']
  #allocation3 [shape = 'f32[8,32]{1,0:T(8,128)}', space=vmem, size = 0x1000, scoped, tag = 'scratch operand']
  #allocation4 [shape = 'f32[1,1]{1,0:T(1,128)S(1)}', space=vmem, size = 0x200, scoped, tag = 'scoped memory for tpu_custom_call.1']
  %s0 = inlined_call_operand.vmem [shape: f32[8,4], index: 0, kind: input, shape index: {}]
  %s1 = inlined_call_operand.vmem [shape: f32[4,32], index: 1, kind: input, shape index: {}]
  %s2 = inlined_call_operand.vmem [shape: f32[1,32], index: 2, kind: input, shape index: {}]
  %s3 = inlined_call_operand.hbm [shape: f32[32,128], index: 3, kind: input, shape index: {}]
  %s4 = inlined_call_operand.hbm [shape: f32[32,128], index: 4, kind: input, shape index: {}]
  %s5 = inlined_call_operand.vmem [shape: f32[1,128], index: 5, kind: input, shape index: {}]
  %s6 = inlined_call_operand.hbm [shape: f32[32,128], index: 6, kind: input, shape index: {}]
  %s7 = inlined_call_operand.hbm [shape: f32[32,128], index: 7, kind: input, shape index: {}]
  %s8 = inlined_call_operand.vmem [shape: f32[1,128], index: 8, kind: input, shape index: {}]
  %s9 = inlined_call_operand.hbm [shape: f32[32,128], index: 9, kind: input, shape index: {}]
  %s10 = inlined_call_operand.hbm [shape: f32[32,128], index: 10, kind: input, shape index: {}]
  %s11 = inlined_call_operand.vmem [shape: f32[1,128], index: 11, kind: input, shape index: {}]
  %s12 = inlined_call_operand.vmem [shape: f32[1,32], index: 12, kind: input, shape index: {}]
  %s13 = inlined_call_operand.<no memory space> [shape: f32[1,1], index: 13, kind: input, shape index: {}]
  %s14 = inlined_call_operand.hbm [shape: f32[1,8], index: 14, kind: output, shape index: {}]
  %s15 = sld [smem:[#allocation0]]
  $region90: #{tpu_custom_call.1} parent=0
    _
  %s17 = ssub.s32 1, %s15
  %s18 = scalar_select 0, %s17, %s15
  %v19 = vstv %s13
  %20 = vst [vmem:[#allocation4] sm:$0x1] %v19
  $region1: #{tpu_custom_call.1} parent=0
    #allocation5 [shape = 'u8[16384]{0}', space=vmem, size = 0x4000, scoped, tag = 'input window, operand 3, single buffered']
    #allocation6 [shape = 's32[1]{0}', space=sflag, size = 0x4, scoped, tag = 'scoped memory for tpu_custom_call.1']
    #allocation7 [shape = 's32[1]{0}', space=sflag, size = 0x4, scoped, tag = 'scoped memory for tpu_custom_call.1']
    #allocation8 [shape = 'u8[16384]{0}', space=vmem, size = 0x4000, scoped, tag = 'input window, operand 4, single buffered']
    #allocation9 [shape = 's32[1]{0}', space=sflag, size = 0x4, scoped, tag = 'scoped memory for tpu_custom_call.1']
    #allocation10 [shape = 'u8[16384]{0}', space=vmem, size = 0x4000, scoped, tag = 'input window, operand 6, single buffered']
    #allocation11 [shape = 'u8[16384]{0}', space=vmem, size = 0x4000, scoped, tag = 'input window, operand 7, single buffered']
    #allocation12 [shape = 's32[1]{0}', space=sflag, size = 0x4, scoped, tag = 'scoped memory for tpu_custom_call.1']
    #allocation13 [shape = 'u8[16384]{0}', space=vmem, size = 0x4000, scoped, tag = 'input window, operand 9, single buffered']
    #allocation14 [shape = 'u8[16384]{0}', space=vmem, size = 0x4000, scoped, tag = 'input window, operand 10, single buffered']
    #allocation15 [shape = 's32[1]{0}', space=sflag, size = 0x4, scoped, tag = 'scoped memory for tpu_custom_call.1']
    #allocation16 [shape = 'u8[512]{0}', space=vmem, size = 0x400, scoped, tag = 'output window, operand 0, single buffered']
    %21 = vsyncpa [#allocation6], 0
    %22 = vsyncpa [#allocation9], 0
    %23 = vsyncpa [#allocation12], 0
    %24 = vsyncpa [#allocation15], 0
    %25 = vsyncpa [#allocation7], 0
    // Predicated region
    $region2: #{tpu_custom_call.1} parent=1 // pred_check
      _
    $region3: #{tpu_custom_call.1} parent=1 // pred_check_branch
      %27 = sbr.rel (0) target = $region5
    $region4: #{tpu_custom_call.1} parent=1 // pred_region
      _
    $region5: #{tpu_custom_call.1} parent=1 // pred_fallthru
      _
    // Predicated region
    $region6: #{tpu_custom_call.1} parent=1 // pred_check
      _
    $region7: #{tpu_custom_call.1} parent=1 // pred_check_branch
      %29 = sbr.rel (0) target = $region9
    $region8: #{tpu_custom_call.1} parent=1 // pred_region
      _
    $region9: #{tpu_custom_call.1} parent=1 // pred_fallthru
      _
    // Predicated region
    $region10: #{tpu_custom_call.1} parent=1 // pred_check
      _
    $region11: #{tpu_custom_call.1} parent=1 // pred_check_branch
      %31 = sbr.rel (0) target = $region13
    $region12: #{tpu_custom_call.1} parent=1 // pred_region
      _
    $region13: #{tpu_custom_call.1} parent=1 // pred_fallthru
      _
    // Predicated region
    $region14: #{tpu_custom_call.1} parent=1 // pred_check
      _
    $region15: #{tpu_custom_call.1} parent=1 // pred_check_branch
      %33 = sbr.rel (0) target = $region17
    $region16: #{tpu_custom_call.1} parent=1 // pred_region
      %35 = vsyncadd [#allocation6], 0
      %s36 = sshll.u32 %s3, 4
      %s37 = int_to_ptr.hbm [resolvable:$true] %s36
      %s38 = sshll.u32 [#allocation5], 4
      %s39 = int_to_ptr.vmem [resolvable:$true] %s38
      %44 = dma.hbm_to_vmem [thread:$0]  %s37, 512, %s39, [#allocation6], 128, 128, 8
    $region17: #{tpu_custom_call.1} parent=1 // pred_fallthru
      _
    // Predicated region
    $region18: #{tpu_custom_call.1} parent=1 // pred_check
      _
    $region19: #{tpu_custom_call.1} parent=1 // pred_check_branch
      %46 = sbr.rel (0) target = $region21
    $region20: #{tpu_custom_call.1} parent=1 // pred_region
      %48 = vsyncadd [#allocation9], 0
      %s49 = sshll.u32 %s4, 4
      %s50 = int_to_ptr.hbm [resolvable:$true] %s49
      %s51 = sshll.u32 [#allocation8], 4
      %s52 = int_to_ptr.vmem [resolvable:$true] %s51
      %57 = dma.hbm_to_vmem [thread:$0]  %s50, 512, %s52, [#allocation9], 128, 128, 8
    $region21: #{tpu_custom_call.1} parent=1 // pred_fallthru
      _
    // Predicated region
    $region22: #{tpu_custom_call.1} parent=1 // pred_check
      _
    $region23: #{tpu_custom_call.1} parent=1 // pred_check_branch
      %59 = sbr.rel (0) target = $region25
    $region24: #{tpu_custom_call.1} parent=1 // pred_region
      _
    $region25: #{tpu_custom_call.1} parent=1 // pred_fallthru
      _
    // Predicated region
    $region26: #{tpu_custom_call.1} parent=1 // pred_check
      _
    $region27: #{tpu_custom_call.1} parent=1 // pred_check_branch
      %61 = sbr.rel (0) target = $region29
    $region28: #{tpu_custom_call.1} parent=1 // pred_region
      %63 = vsyncadd [#allocation9], 0
      %s64 = sshll.u32 %s6, 4
      %s65 = int_to_ptr.hbm [resolvable:$true] %s64
      %s66 = sshll.u32 [#allocation10], 4
      %s67 = int_to_ptr.vmem [resolvable:$true] %s66
      %72 = dma.hbm_to_vmem [thread:$0]  %s65, 512, %s67, [#allocation9], 128, 128, 8
    $region29: #{tpu_custom_call.1} parent=1 // pred_fallthru
      _
    // Predicated region
    $region30: #{tpu_custom_call.1} parent=1 // pred_check
      _
    $region31: #{tpu_custom_call.1} parent=1 // pred_check_branch
      %74 = sbr.rel (0) target = $region33
    $region32: #{tpu_custom_call.1} parent=1 // pred_region
      %76 = vsyncadd [#allocation12], 0
      %s77 = sshll.u32 %s7, 4
      %s78 = int_to_ptr.hbm [resolvable:$true] %s77
      %s79 = sshll.u32 [#allocation11], 4
      %s80 = int_to_ptr.vmem [resolvable:$true] %s79
      %85 = dma.hbm_to_vmem [thread:$0]  %s78, 512, %s80, [#allocation12], 128, 128, 8
    $region33: #{tpu_custom_call.1} parent=1 // pred_fallthru
      _
    // Predicated region
    $region34: #{tpu_custom_call.1} parent=1 // pred_check
      _
    $region35: #{tpu_custom_call.1} parent=1 // pred_check_branch
      %87 = sbr.rel (0) target = $region37
    $region36: #{tpu_custom_call.1} parent=1 // pred_region
      _
    $region37: #{tpu_custom_call.1} parent=1 // pred_fallthru
      _
    // Predicated region
    $region38: #{tpu_custom_call.1} parent=1 // pred_check
      _
    $region39: #{tpu_custom_call.1} parent=1 // pred_check_branch
      %89 = sbr.rel (0) target = $region41
    $region40: #{tpu_custom_call.1} parent=1 // pred_region
      %91 = vsyncadd [#allocation12], 0
      %s92 = sshll.u32 %s9, 4
      %s93 = int_to_ptr.hbm [resolvable:$true] %s92
      %s94 = sshll.u32 [#allocation13], 4
      %s95 = int_to_ptr.vmem [resolvable:$true] %s94
      %100 = dma.hbm_to_vmem [thread:$0]  %s93, 512, %s95, [#allocation12], 128, 128, 8
    $region41: #{tpu_custom_call.1} parent=1 // pred_fallthru
      _
    // Predicated region
    $region42: #{tpu_custom_call.1} parent=1 // pred_check
      _
    $region43: #{tpu_custom_call.1} parent=1 // pred_check_branch
      %102 = sbr.rel (0) target = $region45
    $region44: #{tpu_custom_call.1} parent=1 // pred_region
      %104 = vsyncadd [#allocation15], 0
      %s105 = sshll.u32 %s10, 4
      %s106 = int_to_ptr.hbm [resolvable:$true] %s105
      %s107 = sshll.u32 [#allocation14], 4
      %s108 = int_to_ptr.vmem [resolvable:$true] %s107
      %113 = dma.hbm_to_vmem [thread:$0]  %s106, 512, %s108, [#allocation15], 128, 128, 8
    $region45: #{tpu_custom_call.1} parent=1 // pred_fallthru
      _
    // Predicated region
    $region46: #{tpu_custom_call.1} parent=1 // pred_check
      _
    $region47: #{tpu_custom_call.1} parent=1 // pred_check_branch
      %115 = sbr.rel (0) target = $region49
    $region48: #{tpu_custom_call.1} parent=1 // pred_region
      _
    $region49: #{tpu_custom_call.1} parent=1 // pred_fallthru
      _
    // Predicated region
    $region50: #{tpu_custom_call.1} parent=1 // pred_check
      _
    $region51: #{tpu_custom_call.1} parent=1 // pred_check_branch
      %117 = sbr.rel (0) target = $region53
    $region52: #{tpu_custom_call.1} parent=1 // pred_region
      _
    $region53: #{tpu_custom_call.1} parent=1 // pred_fallthru
      _
    // Predicated region
    $region54: #{tpu_custom_call.1} parent=1 // pred_check
      _
    $region55: #{tpu_custom_call.1} parent=1 // pred_check_branch
      %119 = sbr.rel (0) target = $region57
    $region56: #{tpu_custom_call.1} parent=1 // pred_region
      _
    $region57: #{tpu_custom_call.1} parent=1 // pred_fallthru
      _
    // Predicated region
    $region58: #{tpu_custom_call.1} parent=1 // pred_check
      _
    $region59: #{tpu_custom_call.1} parent=1 // pred_check_branch
      %121 = sbr.rel (0) target = $region61
    $region60: #{tpu_custom_call.1} parent=1 // pred_region
      %123 = dma.done [#allocation6], 512
    $region61: #{tpu_custom_call.1} parent=1 // pred_fallthru
      _
    // Predicated region
    $region62: #{tpu_custom_call.1} parent=1 // pred_check
      _
    $region63: #{tpu_custom_call.1} parent=1 // pred_check_branch
      %125 = sbr.rel (0) target = $region65
    $region64: #{tpu_custom_call.1} parent=1 // pred_region
      %127 = dma.done [#allocation9], 512
    $region65: #{tpu_custom_call.1} parent=1 // pred_fallthru
      _
    // Predicated region
    $region66: #{tpu_custom_call.1} parent=1 // pred_check
      _
    $region67: #{tpu_custom_call.1} parent=1 // pred_check_branch
      %129 = sbr.rel (0) target = $region69
    $region68: #{tpu_custom_call.1} parent=1 // pred_region
      %131 = dma.done [#allocation9], 512
    $region69: #{tpu_custom_call.1} parent=1 // pred_fallthru
      _
    // Predicated region
    $region70: #{tpu_custom_call.1} parent=1 // pred_check
      _
    $region71: #{tpu_custom_call.1} parent=1 // pred_check_branch
      %133 = sbr.rel (0) target = $region73
    $region72: #{tpu_custom_call.1} parent=1 // pred_region
      %135 = dma.done [#allocation12], 512
    $region73: #{tpu_custom_call.1} parent=1 // pred_fallthru
      _
    // Predicated region
    $region74: #{tpu_custom_call.1} parent=1 // pred_check
      _
    $region75: #{tpu_custom_call.1} parent=1 // pred_check_branch
      %137 = sbr.rel (0) target = $region77
    $region76: #{tpu_custom_call.1} parent=1 // pred_region
      %139 = dma.done [#allocation12], 512
    $region77: #{tpu_custom_call.1} parent=1 // pred_fallthru
      _
    // Predicated region
    $region78: #{tpu_custom_call.1} parent=1 // pred_check
      _
    $region79: #{tpu_custom_call.1} parent=1 // pred_check_branch
      %141 = sbr.rel (0) target = $region81
    $region80: #{tpu_custom_call.1} parent=1 // pred_region
      %143 = dma.done [#allocation15], 512
    $region81: #{tpu_custom_call.1} parent=1 // pred_fallthru
      _
    %v144 = vld [vmem:[%s0] sm:$0xff]
    %v145 = vld [vmem:[%s1] sm:$0xf]
    %v146 = vld [vmem:[%s2] sm:$0x1]
    %v148 = vperm.slane %v146, 0
    %vm150 = vcmask 31744
    %v152 = vsel %vm150, %v144, 0
    %vm154 = vcmask 1043456
    %v156 = vsel %vm154, %v145, 0
    %158 = vmatpush.msra.mxu0 0.0
    %159 = vmatpush.msra.mxu0 0.0
    %160 = vmatpush.msra.mxu0 0.0
    %161 = vmatpush.msra.mxu0 0.0
    %162 = vmatpush.msra.mxu0 0.0
    %163 = vmatpush.msra.mxu0 0.0
    %164 = vmatpush.msra.mxu0 0.0
    %165 = vmatpush.msra.mxu0 0.0
    %166 = vmatpush.msra.mxu0 0.0
    %167 = vmatpush.msra.mxu0 0.0
    %168 = vmatpush.msra.mxu0 0.0
    %169 = vmatpush.msra.mxu0 0.0
    %170 = vmatpush.msra.mxu0 0.0
    %171 = vmatpush.msra.mxu0 0.0
    %172 = vmatpush.msra.mxu0 0.0
    %173 = vmatpush.msra.mxu0 %v156
    %174 = vmatmul.f32.gmra.mxu0 %v152
    %v175 = vpop.f32.mrf.mxu0
    %v176 = vadd.f32 %v148, %v175
    %177 = vdwg.mxu0
    %v178 = vld [vmem:[#allocation5] sm:$0xff]
    %v179 = vld [vmem:[#allocation5 + $0x8] sm:$0xff]
    %v180 = vld [vmem:[#allocation5 + $0x10] sm:$0xff]
    %v181 = vld [vmem:[#allocation5 + $0x18] sm:$0xff]
    %v182 = vld [vmem:[%s5] sm:$0x1]
    %v184 = vperm.slane %v182, 0
    %vm186 = vcmask 261120
    %v188 = vsel %vm186, %v176, 0
    %190 = vmatpush.msra.mxu0 0.0
    %191 = vmatpush.msra.mxu0 0.0
    %192 = vmatpush.msra.mxu0 0.0
    %193 = vmatpush.msra.mxu0 0.0
    %194 = vmatpush.msra.mxu0 0.0
    %195 = vmatpush.msra.mxu0 0.0
    %196 = vmatpush.msra.mxu0 0.0
    %197 = vmatpush.msra.mxu0 0.0
    %198 = vmatpush.msra.mxu0 0.0
    %199 = vmatpush.msra.mxu0 0.0
    %200 = vmatpush.msra.mxu0 0.0
    %201 = vmatpush.msra.mxu0 0.0
    %202 = vmatpush.msra.mxu0 %v181
    %203 = vmatpush.msra.mxu0 %v180
    %204 = vmatpush.msra.mxu0 %v179
    %205 = vmatpush.msra.mxu0 %v178
    %206 = vmatmul.f32.gmra.mxu0 %v188
    %v207 = vpop.f32.mrf.mxu0
    %v208 = vadd.f32 %v184, %v207
    %209 = vdwg.mxu0
    %210 = vst [vmem:[#allocation2] sm:$0xff] %v208
    %v211 = vld [vmem:[#allocation8] sm:$0xff]
    %v212 = vld [vmem:[#allocation8 + $0x8] sm:$0xff]
    %v213 = vld [vmem:[#allocation8 + $0x10] sm:$0xff]
    %v214 = vld [vmem:[#allocation8 + $0x18] sm:$0xff]
    %v215 = vld [vmem:[#allocation10] sm:$0xff]
    %v216 = vld [vmem:[#allocation10 + $0x8] sm:$0xff]
    %v217 = vld [vmem:[#allocation10 + $0x10] sm:$0xff]
    %v218 = vld [vmem:[#allocation10 + $0x18] sm:$0xff]
    %v219 = vld [vmem:[#allocation11] sm:$0xff]
    %v220 = vld [vmem:[#allocation11 + $0x8] sm:$0xff]
    %v221 = vld [vmem:[#allocation11 + $0x10] sm:$0xff]
    %v222 = vld [vmem:[#allocation11 + $0x18] sm:$0xff]
    %v223 = vld [vmem:[#allocation13] sm:$0xff]
    %v224 = vld [vmem:[#allocation13 + $0x8] sm:$0xff]
    %v225 = vld [vmem:[#allocation13 + $0x10] sm:$0xff]
    %v226 = vld [vmem:[#allocation13 + $0x18] sm:$0xff]
    %v227 = vld [vmem:[#allocation14] sm:$0xff]
    %v228 = vld [vmem:[#allocation14 + $0x8] sm:$0xff]
    %v229 = vld [vmem:[#allocation14 + $0x10] sm:$0xff]
    %v230 = vld [vmem:[#allocation14 + $0x18] sm:$0xff]
    %v231 = vld [vmem:[%s8] sm:$0x1]
    %v232 = vld [vmem:[%s11] sm:$0x1]
    %v233 = vlaneseq
    %v234 = vand.u32 %v233, 127
    %vm235 = vcmp.ge.s32.totalorder %v234, 64
    %vm236 = vcmp.lt.s32.totalorder %v234, 96
    %vm237 = vmand %vm235, %vm236
    %v238 = vsel %vm237, 1.0, 0.5
    %v239 = vsel %vm237, 0.0, 0.5
    %v240 = vld [vmem:[#allocation2] sm:$0x1]
    %v242 = vsel %vm186, 0.0, 0
    %244 = vmatpush.msra.mxu0 0.0
    %245 = vmatpush.msra.mxu0 0.0
    %246 = vmatpush.msra.mxu0 0.0
    %247 = vmatpush.msra.mxu0 0.0
    %248 = vmatpush.msra.mxu0 0.0
    %249 = vmatpush.msra.mxu0 0.0
    %250 = vmatpush.msra.mxu0 0.0
    %251 = vmatpush.msra.mxu0 0.0
    %252 = vmatpush.msra.mxu0 0.0
    %253 = vmatpush.msra.mxu0 0.0
    %254 = vmatpush.msra.mxu0 0.0
    %255 = vmatpush.msra.mxu0 0.0
    %256 = vmatpush.msra.mxu0 %v214
    %257 = vmatpush.msra.mxu0 %v213
    %258 = vmatpush.msra.mxu0 %v212
    %259 = vmatpush.msra.mxu0 %v211
    %260 = vmatmul.f32.gmra.mxu0 %v242
    %v261 = vpop.f32.mrf.mxu0
    %v262 = vadd.f32 0.0, %v261
    %263 = vdwg.mxu0
    %v264 = vadd.f32 %v240, %v262
    %265 = vmatpush.msra.mxu0 0.0
    %266 = vmatpush.msra.mxu0 0.0
    %267 = vmatpush.msra.mxu0 0.0
    %268 = vmatpush.msra.mxu0 0.0
    %269 = vmatpush.msra.mxu0 0.0
    %270 = vmatpush.msra.mxu0 0.0
    %271 = vmatpush.msra.mxu0 0.0
    %272 = vmatpush.msra.mxu0 0.0
    %273 = vmatpush.msra.mxu0 0.0
    %274 = vmatpush.msra.mxu0 0.0
    %275 = vmatpush.msra.mxu0 0.0
    %276 = vmatpush.msra.mxu0 0.0
    %277 = vmatpush.msra.mxu0 %v222
    %278 = vmatpush.msra.mxu0 %v221
    %279 = vmatpush.msra.mxu0 %v220
    %280 = vmatpush.msra.mxu0 %v219
    %281 = vmatmul.f32.gmra.mxu0 %v242
    %v282 = vpop.f32.mrf.mxu0
    %v283 = vadd.f32 0.0, %v282
    %284 = vdwg.mxu0
    %285 = vmatpush.msra.mxu0 0.0
    %286 = vmatpush.msra.mxu0 0.0
    %287 = vmatpush.msra.mxu0 0.0
    %288 = vmatpush.msra.mxu0 0.0
    %289 = vmatpush.msra.mxu0 0.0
    %290 = vmatpush.msra.mxu0 0.0
    %291 = vmatpush.msra.mxu0 0.0
    %292 = vmatpush.msra.mxu0 0.0
    %293 = vmatpush.msra.mxu0 0.0
    %294 = vmatpush.msra.mxu0 0.0
    %295 = vmatpush.msra.mxu0 0.0
    %296 = vmatpush.msra.mxu0 0.0
    %297 = vmatpush.msra.mxu0 %v218
    %298 = vmatpush.msra.mxu0 %v217
    %299 = vmatpush.msra.mxu0 %v216
    %300 = vmatpush.msra.mxu0 %v215
    %301 = vmatmul.f32.gmra.mxu0 %v242
    %v302 = vpop.f32.mrf.mxu0
    %v303 = vadd.f32 %v283, %v302
    %304 = vdwg.mxu0
    %v305 = vadd.f32 %v303, %v231
    %306 = vmatpush.msra.mxu0 0.0
    %307 = vmatpush.msra.mxu0 0.0
    %308 = vmatpush.msra.mxu0 0.0
    %309 = vmatpush.msra.mxu0 0.0
    %310 = vmatpush.msra.mxu0 0.0
    %311 = vmatpush.msra.mxu0 0.0
    %312 = vmatpush.msra.mxu0 0.0
    %313 = vmatpush.msra.mxu0 0.0
    %314 = vmatpush.msra.mxu0 0.0
    %315 = vmatpush.msra.mxu0 0.0
    %316 = vmatpush.msra.mxu0 0.0
    %317 = vmatpush.msra.mxu0 0.0
    %318 = vmatpush.msra.mxu0 %v230
    %319 = vmatpush.msra.mxu0 %v229
    %320 = vmatpush.msra.mxu0 %v228
    %321 = vmatpush.msra.mxu0 %v227
    %322 = vmatmul.f32.gmra.mxu0 %v242
    %v323 = vpop.f32.mrf.mxu0
    %v324 = vadd.f32 0.0, %v323
    %325 = vdwg.mxu0
    %326 = vmatpush.msra.mxu0 0.0
    %327 = vmatpush.msra.mxu0 0.0
    %328 = vmatpush.msra.mxu0 0.0
    %329 = vmatpush.msra.mxu0 0.0
    %330 = vmatpush.msra.mxu0 0.0
    %331 = vmatpush.msra.mxu0 0.0
    %332 = vmatpush.msra.mxu0 0.0
    %333 = vmatpush.msra.mxu0 0.0
    %334 = vmatpush.msra.mxu0 0.0
    %335 = vmatpush.msra.mxu0 0.0
    %336 = vmatpush.msra.mxu0 0.0
    %337 = vmatpush.msra.mxu0 0.0
    %338 = vmatpush.msra.mxu0 %v226
    %339 = vmatpush.msra.mxu0 %v225
    %340 = vmatpush.msra.mxu0 %v224
    %341 = vmatpush.msra.mxu0 %v223
    %342 = vmatmul.f32.gmra.mxu0 %v242
    %v343 = vpop.f32.mrf.mxu0
    %v344 = vadd.f32 %v324, %v343
    %345 = vdwg.mxu0
    %v346 = vadd.f32 %v344, %v232
    %v347 = vmul.f32 %v264, %v238
    %v348 = vtanh.pop %v347
    %v349 = vmul.f32 %v348, %v238
    %v350 = vadd.f32 %v349, %v239
    %v351 = vmul.f32 %v350, 0.0
    %353 = vrot.lane.b32.xlu0 %v350, 64
    %v354 = vpop.permute.xlu0 %353
    %v356 = vmul.f32 %v350, %v354
    %358 = vrot.lane.b32.xlu0 %v356, 32
    %v359 = vpop.permute.xlu0 %358
    %v361 = vadd.f32 %v351, %v359
    %v362 = vtanh.pop %v361
    %364 = vrot.lane.b32.xlu0 %v362, 64
    %v365 = vpop.permute.xlu0 %364
    %v367 = vmul.f32 %v350, %v365
    %v368 = vmul.f32 %v305, %v238
    %v369 = vtanh.pop %v368
    %v370 = vmul.f32 %v369, %v238
    %v371 = vadd.f32 %v370, %v239
    %v372 = vmul.f32 %v371, 0.0
    %374 = vrot.lane.b32.xlu0 %v371, 64
    %v375 = vpop.permute.xlu0 %374
    %v377 = vmul.f32 %v371, %v375
    %379 = vrot.lane.b32.xlu0 %v377, 32
    %v380 = vpop.permute.xlu0 %379
    %v382 = vadd.f32 %v372, %v380
    %v383 = vtanh.pop %v382
    %385 = vrot.lane.b32.xlu0 %v383, 64
    %v386 = vpop.permute.xlu0 %385
    %v388 = vmul.f32 %v371, %v386
    %v389 = vmul.f32 %v346, %v238
    %v390 = vtanh.pop %v389
    %v391 = vmul.f32 %v390, %v238
    %v392 = vadd.f32 %v391, %v239
    %v393 = vmul.f32 %v392, 0.0
    %395 = vrot.lane.b32.xlu0 %v392, 64
    %v396 = vpop.permute.xlu0 %395
    %v398 = vmul.f32 %v392, %v396
    %400 = vrot.lane.b32.xlu0 %v398, 32
    %v401 = vpop.permute.xlu0 %400
    %v403 = vadd.f32 %v393, %v401
    %v404 = vtanh.pop %v403
    %406 = vrot.lane.b32.xlu0 %v404, 64
    %v407 = vpop.permute.xlu0 %406
    %v409 = vmul.f32 %v392, %v407
    %411 = vrot.lane.b32.xlu0 %v409, 32
    %v412 = vpop.permute.xlu0 %411
    %vm414 = vcmask 253952
    %415 = vst.msk [vmem:[#allocation3] sm:$0x1] %vm414, %v412
    %v416 = vld [vmem:[#allocation2 + $0x1] sm:$0x1]
    %418 = vrot.lane.b32.xlu0 %v367, 32
    %v419 = vpop.permute.xlu0 %418
    %v420 = vsel %vm186, %v419, 0
    %422 = vmatpush.msra.mxu0 0.0
    %423 = vmatpush.msra.mxu0 0.0
    %424 = vmatpush.msra.mxu0 0.0
    %425 = vmatpush.msra.mxu0 0.0
    %426 = vmatpush.msra.mxu0 0.0
    %427 = vmatpush.msra.mxu0 0.0
    %428 = vmatpush.msra.mxu0 0.0
    %429 = vmatpush.msra.mxu0 0.0
    %430 = vmatpush.msra.mxu0 0.0
    %431 = vmatpush.msra.mxu0 0.0
    %432 = vmatpush.msra.mxu0 0.0
    %433 = vmatpush.msra.mxu0 0.0
    %434 = vmatpush.msra.mxu0 %v214
    %435 = vmatpush.msra.mxu0 %v213
    %436 = vmatpush.msra.mxu0 %v212
    %437 = vmatpush.msra.mxu0 %v211
    %438 = vmatmul.f32.gmra.mxu0 %v420
    %v439 = vpop.f32.mrf.mxu0
    %v440 = vadd.f32 0.0, %v439
    %441 = vdwg.mxu0
    %v442 = vadd.f32 %v416, %v440
    %444 = vrot.lane.b32.xlu0 %v388, 32
    %v445 = vpop.permute.xlu0 %444
    %v446 = vsel %vm186, %v445, 0
    %448 = vmatpush.msra.mxu0 0.0
    %449 = vmatpush.msra.mxu0 0.0
    %450 = vmatpush.msra.mxu0 0.0
    %451 = vmatpush.msra.mxu0 0.0
    %452 = vmatpush.msra.mxu0 0.0
    %453 = vmatpush.msra.mxu0 0.0
    %454 = vmatpush.msra.mxu0 0.0
    %455 = vmatpush.msra.mxu0 0.0
    %456 = vmatpush.msra.mxu0 0.0
    %457 = vmatpush.msra.mxu0 0.0
    %458 = vmatpush.msra.mxu0 0.0
    %459 = vmatpush.msra.mxu0 0.0
    %460 = vmatpush.msra.mxu0 %v222
    %461 = vmatpush.msra.mxu0 %v221
    %462 = vmatpush.msra.mxu0 %v220
    %463 = vmatpush.msra.mxu0 %v219
    %464 = vmatmul.f32.gmra.mxu0 %v446
    %v465 = vpop.f32.mrf.mxu0
    %v466 = vadd.f32 0.0, %v465
    %467 = vdwg.mxu0
    %468 = vmatpush.msra.mxu0 0.0
    %469 = vmatpush.msra.mxu0 0.0
    %470 = vmatpush.msra.mxu0 0.0
    %471 = vmatpush.msra.mxu0 0.0
    %472 = vmatpush.msra.mxu0 0.0
    %473 = vmatpush.msra.mxu0 0.0
    %474 = vmatpush.msra.mxu0 0.0
    %475 = vmatpush.msra.mxu0 0.0
    %476 = vmatpush.msra.mxu0 0.0
    %477 = vmatpush.msra.mxu0 0.0
    %478 = vmatpush.msra.mxu0 0.0
    %479 = vmatpush.msra.mxu0 0.0
    %480 = vmatpush.msra.mxu0 %v218
    %481 = vmatpush.msra.mxu0 %v217
    %482 = vmatpush.msra.mxu0 %v216
    %483 = vmatpush.msra.mxu0 %v215
    %484 = vmatmul.f32.gmra.mxu0 %v420
    %v485 = vpop.f32.mrf.mxu0
    %v486 = vadd.f32 %v466, %v485
    %487 = vdwg.mxu0
    %v488 = vadd.f32 %v486, %v231
    %v489 = vsel %vm186, %v412, 0
    %491 = vmatpush.msra.mxu0 0.0
    %492 = vmatpush.msra.mxu0 0.0
    %493 = vmatpush.msra.mxu0 0.0
    %494 = vmatpush.msra.mxu0 0.0
    %495 = vmatpush.msra.mxu0 0.0
    %496 = vmatpush.msra.mxu0 0.0
    %497 = vmatpush.msra.mxu0 0.0
    %498 = vmatpush.msra.mxu0 0.0
    %499 = vmatpush.msra.mxu0 0.0
    %500 = vmatpush.msra.mxu0 0.0
    %501 = vmatpush.msra.mxu0 0.0
    %502 = vmatpush.msra.mxu0 0.0
    %503 = vmatpush.msra.mxu0 %v230
    %504 = vmatpush.msra.mxu0 %v229
    %505 = vmatpush.msra.mxu0 %v228
    %506 = vmatpush.msra.mxu0 %v227
    %507 = vmatmul.f32.gmra.mxu0 %v489
    %v508 = vpop.f32.mrf.mxu0
    %v509 = vadd.f32 0.0, %v508
    %510 = vdwg.mxu0
    %511 = vmatpush.msra.mxu0 0.0
    %512 = vmatpush.msra.mxu0 0.0
    %513 = vmatpush.msra.mxu0 0.0
    %514 = vmatpush.msra.mxu0 0.0
    %515 = vmatpush.msra.mxu0 0.0
    %516 = vmatpush.msra.mxu0 0.0
    %517 = vmatpush.msra.mxu0 0.0
    %518 = vmatpush.msra.mxu0 0.0
    %519 = vmatpush.msra.mxu0 0.0
    %520 = vmatpush.msra.mxu0 0.0
    %521 = vmatpush.msra.mxu0 0.0
    %522 = vmatpush.msra.mxu0 0.0
    %523 = vmatpush.msra.mxu0 %v226
    %524 = vmatpush.msra.mxu0 %v225
    %525 = vmatpush.msra.mxu0 %v224
    %526 = vmatpush.msra.mxu0 %v223
    %527 = vmatmul.f32.gmra.mxu0 %v446
    %v528 = vpop.f32.mrf.mxu0
    %v529 = vadd.f32 %v509, %v528
    %530 = vdwg.mxu0
    %v531 = vadd.f32 %v529, %v232
    %v532 = vmul.f32 %v442, %v238
    %v533 = vtanh.pop %v532
    %v534 = vmul.f32 %v533, %v238
    %v535 = vadd.f32 %v534, %v239
    %v536 = vmul.f32 %v535, %v361
    %538 = vrot.lane.b32.xlu0 %v535, 64
    %v539 = vpop.permute.xlu0 %538
    %v541 = vmul.f32 %v535, %v539
    %543 = vrot.lane.b32.xlu0 %v541, 32
    %v544 = vpop.permute.xlu0 %543
    %v546 = vadd.f32 %v536, %v544
    %v547 = vtanh.pop %v546
    %549 = vrot.lane.b32.xlu0 %v547, 64
    %v550 = vpop.permute.xlu0 %549
    %v552 = vmul.f32 %v535, %v550
    %v553 = vmul.f32 %v488, %v238
    %v554 = vtanh.pop %v553
    %v555 = vmul.f32 %v554, %v238
    %v556 = vadd.f32 %v555, %v239
    %v557 = vmul.f32 %v556, %v382
    %559 = vrot.lane.b32.xlu0 %v556, 64
    %v560 = vpop.permute.xlu0 %559
    %v562 = vmul.f32 %v556, %v560
    %564 = vrot.lane.b32.xlu0 %v562, 32
    %v565 = vpop.permute.xlu0 %564
    %v567 = vadd.f32 %v557, %v565
    %v568 = vtanh.pop %v567
    %570 = vrot.lane.b32.xlu0 %v568, 64
    %v571 = vpop.permute.xlu0 %570
    %v573 = vmul.f32 %v556, %v571
    %v574 = vmul.f32 %v531, %v238
    %v575 = vtanh.pop %v574
    %v576 = vmul.f32 %v575, %v238
    %v577 = vadd.f32 %v576, %v239
    %v578 = vmul.f32 %v577, %v403
    %580 = vrot.lane.b32.xlu0 %v577, 64
    %v581 = vpop.permute.xlu0 %580
    %v583 = vmul.f32 %v577, %v581
    %585 = vrot.lane.b32.xlu0 %v583, 32
    %v586 = vpop.permute.xlu0 %585
    %v588 = vadd.f32 %v578, %v586
    %v589 = vtanh.pop %v588
    %591 = vrot.lane.b32.xlu0 %v589, 64
    %v592 = vpop.permute.xlu0 %591
    %v594 = vmul.f32 %v577, %v592
    %596 = vrot.lane.b32.xlu0 %v594, 32
    %v597 = vpop.permute.xlu0 %596
    %599 = vst.msk [vmem:[#allocation3] sm:$0x1] %vm414, %v597
    %v600 = vld [vmem:[#allocation2 + $0x2] sm:$0x1]
    %602 = vrot.lane.b32.xlu0 %v552, 32
    %v603 = vpop.permute.xlu0 %602
    %v604 = vsel %vm186, %v603, 0
    %606 = vmatpush.msra.mxu0 0.0
    %607 = vmatpush.msra.mxu0 0.0
    %608 = vmatpush.msra.mxu0 0.0
    %609 = vmatpush.msra.mxu0 0.0
    %610 = vmatpush.msra.mxu0 0.0
    %611 = vmatpush.msra.mxu0 0.0
    %612 = vmatpush.msra.mxu0 0.0
    %613 = vmatpush.msra.mxu0 0.0
    %614 = vmatpush.msra.mxu0 0.0
    %615 = vmatpush.msra.mxu0 0.0
    %616 = vmatpush.msra.mxu0 0.0
    %617 = vmatpush.msra.mxu0 0.0
    %618 = vmatpush.msra.mxu0 %v214
    %619 = vmatpush.msra.mxu0 %v213
    %620 = vmatpush.msra.mxu0 %v212
    %621 = vmatpush.msra.mxu0 %v211
    %622 = vmatmul.f32.gmra.mxu0 %v604
    %v623 = vpop.f32.mrf.mxu0
    %v624 = vadd.f32 0.0, %v623
    %625 = vdwg.mxu0
    %v626 = vadd.f32 %v600, %v624
    %628 = vrot.lane.b32.xlu0 %v573, 32
    %v629 = vpop.permute.xlu0 %628
    %v630 = vsel %vm186, %v629, 0
    %632 = vmatpush.msra.mxu0 0.0
    %633 = vmatpush.msra.mxu0 0.0
    %634 = vmatpush.msra.mxu0 0.0
    %635 = vmatpush.msra.mxu0 0.0
    %636 = vmatpush.msra.mxu0 0.0
    %637 = vmatpush.msra.mxu0 0.0
    %638 = vmatpush.msra.mxu0 0.0
    %639 = vmatpush.msra.mxu0 0.0
    %640 = vmatpush.msra.mxu0 0.0
    %641 = vmatpush.msra.mxu0 0.0
    %642 = vmatpush.msra.mxu0 0.0
    %643 = vmatpush.msra.mxu0 0.0
    %644 = vmatpush.msra.mxu0 %v222
    %645 = vmatpush.msra.mxu0 %v221
    %646 = vmatpush.msra.mxu0 %v220
    %647 = vmatpush.msra.mxu0 %v219
    %648 = vmatmul.f32.gmra.mxu0 %v630
    %v649 = vpop.f32.mrf.mxu0
    %v650 = vadd.f32 0.0, %v649
    %651 = vdwg.mxu0
    %652 = vmatpush.msra.mxu0 0.0
    %653 = vmatpush.msra.mxu0 0.0
    %654 = vmatpush.msra.mxu0 0.0
    %655 = vmatpush.msra.mxu0 0.0
    %656 = vmatpush.msra.mxu0 0.0
    %657 = vmatpush.msra.mxu0 0.0
    %658 = vmatpush.msra.mxu0 0.0
    %659 = vmatpush.msra.mxu0 0.0
    %660 = vmatpush.msra.mxu0 0.0
    %661 = vmatpush.msra.mxu0 0.0
    %662 = vmatpush.msra.mxu0 0.0
    %663 = vmatpush.msra.mxu0 0.0
    %664 = vmatpush.msra.mxu0 %v218
    %665 = vmatpush.msra.mxu0 %v217
    %666 = vmatpush.msra.mxu0 %v216
    %667 = vmatpush.msra.mxu0 %v215
    %668 = vmatmul.f32.gmra.mxu0 %v604
    %v669 = vpop.f32.mrf.mxu0
    %v670 = vadd.f32 %v650, %v669
    %671 = vdwg.mxu0
    %v672 = vadd.f32 %v670, %v231
    %v673 = vsel %vm186, %v597, 0
    %675 = vmatpush.msra.mxu0 0.0
    %676 = vmatpush.msra.mxu0 0.0
    %677 = vmatpush.msra.mxu0 0.0
    %678 = vmatpush.msra.mxu0 0.0
    %679 = vmatpush.msra.mxu0 0.0
    %680 = vmatpush.msra.mxu0 0.0
    %681 = vmatpush.msra.mxu0 0.0
    %682 = vmatpush.msra.mxu0 0.0
    %683 = vmatpush.msra.mxu0 0.0
    %684 = vmatpush.msra.mxu0 0.0
    %685 = vmatpush.msra.mxu0 0.0
    %686 = vmatpush.msra.mxu0 0.0
    %687 = vmatpush.msra.mxu0 %v230
    %688 = vmatpush.msra.mxu0 %v229
    %689 = vmatpush.msra.mxu0 %v228
    %690 = vmatpush.msra.mxu0 %v227
    %691 = vmatmul.f32.gmra.mxu0 %v673
    %v692 = vpop.f32.mrf.mxu0
    %v693 = vadd.f32 0.0, %v692
    %694 = vdwg.mxu0
    %695 = vmatpush.msra.mxu0 0.0
    %696 = vmatpush.msra.mxu0 0.0
    %697 = vmatpush.msra.mxu0 0.0
    %698 = vmatpush.msra.mxu0 0.0
    %699 = vmatpush.msra.mxu0 0.0
    %700 = vmatpush.msra.mxu0 0.0
    %701 = vmatpush.msra.mxu0 0.0
    %702 = vmatpush.msra.mxu0 0.0
    %703 = vmatpush.msra.mxu0 0.0
    %704 = vmatpush.msra.mxu0 0.0
    %705 = vmatpush.msra.mxu0 0.0
    %706 = vmatpush.msra.mxu0 0.0
    %707 = vmatpush.msra.mxu0 %v226
    %708 = vmatpush.msra.mxu0 %v225
    %709 = vmatpush.msra.mxu0 %v224
    %710 = vmatpush.msra.mxu0 %v223
    %711 = vmatmul.f32.gmra.mxu0 %v630
    %v712 = vpop.f32.mrf.mxu0
    %v713 = vadd.f32 %v693, %v712
    %714 = vdwg.mxu0
    %v715 = vadd.f32 %v713, %v232
    %v716 = vmul.f32 %v626, %v238
    %v717 = vtanh.pop %v716
    %v718 = vmul.f32 %v717, %v238
    %v719 = vadd.f32 %v718, %v239
    %v720 = vmul.f32 %v719, %v546
    %722 = vrot.lane.b32.xlu0 %v719, 64
    %v723 = vpop.permute.xlu0 %722
    %v725 = vmul.f32 %v719, %v723
    %727 = vrot.lane.b32.xlu0 %v725, 32
    %v728 = vpop.permute.xlu0 %727
    %v730 = vadd.f32 %v720, %v728
    %v731 = vtanh.pop %v730
    %733 = vrot.lane.b32.xlu0 %v731, 64
    %v734 = vpop.permute.xlu0 %733
    %v736 = vmul.f32 %v719, %v734
    %v737 = vmul.f32 %v672, %v238
    %v738 = vtanh.pop %v737
    %v739 = vmul.f32 %v738, %v238
    %v740 = vadd.f32 %v739, %v239
    %v741 = vmul.f32 %v740, %v567
    %743 = vrot.lane.b32.xlu0 %v740, 64
    %v744 = vpop.permute.xlu0 %743
    %v746 = vmul.f32 %v740, %v744
    %748 = vrot.lane.b32.xlu0 %v746, 32
    %v749 = vpop.permute.xlu0 %748
    %v751 = vadd.f32 %v741, %v749
    %v752 = vtanh.pop %v751
    %754 = vrot.lane.b32.xlu0 %v752, 64
    %v755 = vpop.permute.xlu0 %754
    %v757 = vmul.f32 %v740, %v755
    %v758 = vmul.f32 %v715, %v238
    %v759 = vtanh.pop %v758
    %v760 = vmul.f32 %v759, %v238
    %v761 = vadd.f32 %v760, %v239
    %v762 = vmul.f32 %v761, %v588
    %764 = vrot.lane.b32.xlu0 %v761, 64
    %v765 = vpop.permute.xlu0 %764
    %v767 = vmul.f32 %v761, %v765
    %769 = vrot.lane.b32.xlu0 %v767, 32
    %v770 = vpop.permute.xlu0 %769
    %v772 = vadd.f32 %v762, %v770
    %v773 = vtanh.pop %v772
    %775 = vrot.lane.b32.xlu0 %v773, 64
    %v776 = vpop.permute.xlu0 %775
    %v778 = vmul.f32 %v761, %v776
    %780 = vrot.lane.b32.xlu0 %v778, 32
    %v781 = vpop.permute.xlu0 %780
    %783 = vst.msk [vmem:[#allocation3] sm:$0x1] %vm414, %v781
    %v784 = vld [vmem:[#allocation2 + $0x3] sm:$0x1]
    %786 = vrot.lane.b32.xlu0 %v736, 32
    %v787 = vpop.permute.xlu0 %786
    %v788 = vsel %vm186, %v787, 0
    %790 = vmatpush.msra.mxu0 0.0
    %791 = vmatpush.msra.mxu0 0.0
    %792 = vmatpush.msra.mxu0 0.0
    %793 = vmatpush.msra.mxu0 0.0
    %794 = vmatpush.msra.mxu0 0.0
    %795 = vmatpush.msra.mxu0 0.0
    %796 = vmatpush.msra.mxu0 0.0
    %797 = vmatpush.msra.mxu0 0.0
    %798 = vmatpush.msra.mxu0 0.0
    %799 = vmatpush.msra.mxu0 0.0
    %800 = vmatpush.msra.mxu0 0.0
    %801 = vmatpush.msra.mxu0 0.0
    %802 = vmatpush.msra.mxu0 %v214
    %803 = vmatpush.msra.mxu0 %v213
    %804 = vmatpush.msra.mxu0 %v212
    %805 = vmatpush.msra.mxu0 %v211
    %806 = vmatmul.f32.gmra.mxu0 %v788
    %v807 = vpop.f32.mrf.mxu0
    %v808 = vadd.f32 0.0, %v807
    %809 = vdwg.mxu0
    %v810 = vadd.f32 %v784, %v808
    %812 = vrot.lane.b32.xlu0 %v757, 32
    %v813 = vpop.permute.xlu0 %812
    %v814 = vsel %vm186, %v813, 0
    %816 = vmatpush.msra.mxu0 0.0
    %817 = vmatpush.msra.mxu0 0.0
    %818 = vmatpush.msra.mxu0 0.0
    %819 = vmatpush.msra.mxu0 0.0
    %820 = vmatpush.msra.mxu0 0.0
    %821 = vmatpush.msra.mxu0 0.0
    %822 = vmatpush.msra.mxu0 0.0
    %823 = vmatpush.msra.mxu0 0.0
    %824 = vmatpush.msra.mxu0 0.0
    %825 = vmatpush.msra.mxu0 0.0
    %826 = vmatpush.msra.mxu0 0.0
    %827 = vmatpush.msra.mxu0 0.0
    %828 = vmatpush.msra.mxu0 %v222
    %829 = vmatpush.msra.mxu0 %v221
    %830 = vmatpush.msra.mxu0 %v220
    %831 = vmatpush.msra.mxu0 %v219
    %832 = vmatmul.f32.gmra.mxu0 %v814
    %v833 = vpop.f32.mrf.mxu0
    %v834 = vadd.f32 0.0, %v833
    %835 = vdwg.mxu0
    %836 = vmatpush.msra.mxu0 0.0
    %837 = vmatpush.msra.mxu0 0.0
    %838 = vmatpush.msra.mxu0 0.0
    %839 = vmatpush.msra.mxu0 0.0
    %840 = vmatpush.msra.mxu0 0.0
    %841 = vmatpush.msra.mxu0 0.0
    %842 = vmatpush.msra.mxu0 0.0
    %843 = vmatpush.msra.mxu0 0.0
    %844 = vmatpush.msra.mxu0 0.0
    %845 = vmatpush.msra.mxu0 0.0
    %846 = vmatpush.msra.mxu0 0.0
    %847 = vmatpush.msra.mxu0 0.0
    %848 = vmatpush.msra.mxu0 %v218
    %849 = vmatpush.msra.mxu0 %v217
    %850 = vmatpush.msra.mxu0 %v216
    %851 = vmatpush.msra.mxu0 %v215
    %852 = vmatmul.f32.gmra.mxu0 %v788
    %v853 = vpop.f32.mrf.mxu0
    %v854 = vadd.f32 %v834, %v853
    %855 = vdwg.mxu0
    %v856 = vadd.f32 %v854, %v231
    %v857 = vsel %vm186, %v781, 0
    %859 = vmatpush.msra.mxu0 0.0
    %860 = vmatpush.msra.mxu0 0.0
    %861 = vmatpush.msra.mxu0 0.0
    %862 = vmatpush.msra.mxu0 0.0
    %863 = vmatpush.msra.mxu0 0.0
    %864 = vmatpush.msra.mxu0 0.0
    %865 = vmatpush.msra.mxu0 0.0
    %866 = vmatpush.msra.mxu0 0.0
    %867 = vmatpush.msra.mxu0 0.0
    %868 = vmatpush.msra.mxu0 0.0
    %869 = vmatpush.msra.mxu0 0.0
    %870 = vmatpush.msra.mxu0 0.0
    %871 = vmatpush.msra.mxu0 %v230
    %872 = vmatpush.msra.mxu0 %v229
    %873 = vmatpush.msra.mxu0 %v228
    %874 = vmatpush.msra.mxu0 %v227
    %875 = vmatmul.f32.gmra.mxu0 %v857
    %v876 = vpop.f32.mrf.mxu0
    %v877 = vadd.f32 0.0, %v876
    %878 = vdwg.mxu0
    %879 = vmatpush.msra.mxu0 0.0
    %880 = vmatpush.msra.mxu0 0.0
    %881 = vmatpush.msra.mxu0 0.0
    %882 = vmatpush.msra.mxu0 0.0
    %883 = vmatpush.msra.mxu0 0.0
    %884 = vmatpush.msra.mxu0 0.0
    %885 = vmatpush.msra.mxu0 0.0
    %886 = vmatpush.msra.mxu0 0.0
    %887 = vmatpush.msra.mxu0 0.0
    %888 = vmatpush.msra.mxu0 0.0
    %889 = vmatpush.msra.mxu0 0.0
    %890 = vmatpush.msra.mxu0 0.0
    %891 = vmatpush.msra.mxu0 %v226
    %892 = vmatpush.msra.mxu0 %v225
    %893 = vmatpush.msra.mxu0 %v224
    %894 = vmatpush.msra.mxu0 %v223
    %895 = vmatmul.f32.gmra.mxu0 %v814
    %v896 = vpop.f32.mrf.mxu0
    %v897 = vadd.f32 %v877, %v896
    %898 = vdwg.mxu0
    %v899 = vadd.f32 %v897, %v232
    %v900 = vmul.f32 %v810, %v238
    %v901 = vtanh.pop %v900
    %v902 = vmul.f32 %v901, %v238
    %v903 = vadd.f32 %v902, %v239
    %v904 = vmul.f32 %v903, %v730
    %906 = vrot.lane.b32.xlu0 %v903, 64
    %v907 = vpop.permute.xlu0 %906
    %v909 = vmul.f32 %v903, %v907
    %911 = vrot.lane.b32.xlu0 %v909, 32
    %v912 = vpop.permute.xlu0 %911
    %v914 = vadd.f32 %v904, %v912
    %v915 = vtanh.pop %v914
    %917 = vrot.lane.b32.xlu0 %v915, 64
    %v918 = vpop.permute.xlu0 %917
    %v920 = vmul.f32 %v903, %v918
    %v921 = vmul.f32 %v856, %v238
    %v922 = vtanh.pop %v921
    %v923 = vmul.f32 %v922, %v238
    %v924 = vadd.f32 %v923, %v239
    %v925 = vmul.f32 %v924, %v751
    %927 = vrot.lane.b32.xlu0 %v924, 64
    %v928 = vpop.permute.xlu0 %927
    %v930 = vmul.f32 %v924, %v928
    %932 = vrot.lane.b32.xlu0 %v930, 32
    %v933 = vpop.permute.xlu0 %932
    %v935 = vadd.f32 %v925, %v933
    %v936 = vtanh.pop %v935
    %938 = vrot.lane.b32.xlu0 %v936, 64
    %v939 = vpop.permute.xlu0 %938
    %v941 = vmul.f32 %v924, %v939
    %v942 = vmul.f32 %v899, %v238
    %v943 = vtanh.pop %v942
    %v944 = vmul.f32 %v943, %v238
    %v945 = vadd.f32 %v944, %v239
    %v946 = vmul.f32 %v945, %v772
    %948 = vrot.lane.b32.xlu0 %v945, 64
    %v949 = vpop.permute.xlu0 %948
    %v951 = vmul.f32 %v945, %v949
    %953 = vrot.lane.b32.xlu0 %v951, 32
    %v954 = vpop.permute.xlu0 %953
    %v956 = vadd.f32 %v946, %v954
    %v957 = vtanh.pop %v956
    %959 = vrot.lane.b32.xlu0 %v957, 64
    %v960 = vpop.permute.xlu0 %959
    %v962 = vmul.f32 %v945, %v960
    %964 = vrot.lane.b32.xlu0 %v962, 32
    %v965 = vpop.permute.xlu0 %964
    %967 = vst.msk [vmem:[#allocation3 + $0x1] sm:$0x1] %vm414, %v965
    %v968 = vld [vmem:[#allocation2 + $0x4] sm:$0x1]
    %970 = vrot.lane.b32.xlu0 %v920, 32
    %v971 = vpop.permute.xlu0 %970
    %v972 = vsel %vm186, %v971, 0
    %974 = vmatpush.msra.mxu0 0.0
    %975 = vmatpush.msra.mxu0 0.0
    %976 = vmatpush.msra.mxu0 0.0
    %977 = vmatpush.msra.mxu0 0.0
    %978 = vmatpush.msra.mxu0 0.0
    %979 = vmatpush.msra.mxu0 0.0
    %980 = vmatpush.msra.mxu0 0.0
    %981 = vmatpush.msra.mxu0 0.0
    %982 = vmatpush.msra.mxu0 0.0
    %983 = vmatpush.msra.mxu0 0.0
    %984 = vmatpush.msra.mxu0 0.0
    %985 = vmatpush.msra.mxu0 0.0
    %986 = vmatpush.msra.mxu0 %v214
    %987 = vmatpush.msra.mxu0 %v213
    %988 = vmatpush.msra.mxu0 %v212
    %989 = vmatpush.msra.mxu0 %v211
    %990 = vmatmul.f32.gmra.mxu0 %v972
    %v991 = vpop.f32.mrf.mxu0
    %v992 = vadd.f32 0.0, %v991
    %993 = vdwg.mxu0
    %v994 = vadd.f32 %v968, %v992
    %996 = vrot.lane.b32.xlu0 %v941, 32
    %v997 = vpop.permute.xlu0 %996
    %v998 = vsel %vm186, %v997, 0
    %1000 = vmatpush.msra.mxu0 0.0
    %1001 = vmatpush.msra.mxu0 0.0
    %1002 = vmatpush.msra.mxu0 0.0
    %1003 = vmatpush.msra.mxu0 0.0
    %1004 = vmatpush.msra.mxu0 0.0
    %1005 = vmatpush.msra.mxu0 0.0
    %1006 = vmatpush.msra.mxu0 0.0
    %1007 = vmatpush.msra.mxu0 0.0
    %1008 = vmatpush.msra.mxu0 0.0
    %1009 = vmatpush.msra.mxu0 0.0
    %1010 = vmatpush.msra.mxu0 0.0
    %1011 = vmatpush.msra.mxu0 0.0
    %1012 = vmatpush.msra.mxu0 %v222
    %1013 = vmatpush.msra.mxu0 %v221
    %1014 = vmatpush.msra.mxu0 %v220
    %1015 = vmatpush.msra.mxu0 %v219
    %1016 = vmatmul.f32.gmra.mxu0 %v998
    %v1017 = vpop.f32.mrf.mxu0
    %v1018 = vadd.f32 0.0, %v1017
    %1019 = vdwg.mxu0
    %1020 = vmatpush.msra.mxu0 0.0
    %1021 = vmatpush.msra.mxu0 0.0
    %1022 = vmatpush.msra.mxu0 0.0
    %1023 = vmatpush.msra.mxu0 0.0
    %1024 = vmatpush.msra.mxu0 0.0
    %1025 = vmatpush.msra.mxu0 0.0
    %1026 = vmatpush.msra.mxu0 0.0
    %1027 = vmatpush.msra.mxu0 0.0
    %1028 = vmatpush.msra.mxu0 0.0
    %1029 = vmatpush.msra.mxu0 0.0
    %1030 = vmatpush.msra.mxu0 0.0
    %1031 = vmatpush.msra.mxu0 0.0
    %1032 = vmatpush.msra.mxu0 %v218
    %1033 = vmatpush.msra.mxu0 %v217
    %1034 = vmatpush.msra.mxu0 %v216
    %1035 = vmatpush.msra.mxu0 %v215
    %1036 = vmatmul.f32.gmra.mxu0 %v972
    %v1037 = vpop.f32.mrf.mxu0
    %v1038 = vadd.f32 %v1018, %v1037
    %1039 = vdwg.mxu0
    %v1040 = vadd.f32 %v1038, %v231
    %v1041 = vsel %vm186, %v965, 0
    %1043 = vmatpush.msra.mxu0 0.0
    %1044 = vmatpush.msra.mxu0 0.0
    %1045 = vmatpush.msra.mxu0 0.0
    %1046 = vmatpush.msra.mxu0 0.0
    %1047 = vmatpush.msra.mxu0 0.0
    %1048 = vmatpush.msra.mxu0 0.0
    %1049 = vmatpush.msra.mxu0 0.0
    %1050 = vmatpush.msra.mxu0 0.0
    %1051 = vmatpush.msra.mxu0 0.0
    %1052 = vmatpush.msra.mxu0 0.0
    %1053 = vmatpush.msra.mxu0 0.0
    %1054 = vmatpush.msra.mxu0 0.0
    %1055 = vmatpush.msra.mxu0 %v230
    %1056 = vmatpush.msra.mxu0 %v229
    %1057 = vmatpush.msra.mxu0 %v228
    %1058 = vmatpush.msra.mxu0 %v227
    %1059 = vmatmul.f32.gmra.mxu0 %v1041
    %v1060 = vpop.f32.mrf.mxu0
    %v1061 = vadd.f32 0.0, %v1060
    %1062 = vdwg.mxu0
    %1063 = vmatpush.msra.mxu0 0.0
    %1064 = vmatpush.msra.mxu0 0.0
    %1065 = vmatpush.msra.mxu0 0.0
    %1066 = vmatpush.msra.mxu0 0.0
    %1067 = vmatpush.msra.mxu0 0.0
    %1068 = vmatpush.msra.mxu0 0.0
    %1069 = vmatpush.msra.mxu0 0.0
    %1070 = vmatpush.msra.mxu0 0.0
    %1071 = vmatpush.msra.mxu0 0.0
    %1072 = vmatpush.msra.mxu0 0.0
    %1073 = vmatpush.msra.mxu0 0.0
    %1074 = vmatpush.msra.mxu0 0.0
    %1075 = vmatpush.msra.mxu0 %v226
    %1076 = vmatpush.msra.mxu0 %v225
    %1077 = vmatpush.msra.mxu0 %v224
    %1078 = vmatpush.msra.mxu0 %v223
    %1079 = vmatmul.f32.gmra.mxu0 %v998
    %v1080 = vpop.f32.mrf.mxu0
    %v1081 = vadd.f32 %v1061, %v1080
    %1082 = vdwg.mxu0
    %v1083 = vadd.f32 %v1081, %v232
    %v1084 = vmul.f32 %v994, %v238
    %v1085 = vtanh.pop %v1084
    %v1086 = vmul.f32 %v1085, %v238
    %v1087 = vadd.f32 %v1086, %v239
    %v1088 = vmul.f32 %v1087, %v914
    %1090 = vrot.lane.b32.xlu0 %v1087, 64
    %v1091 = vpop.permute.xlu0 %1090
    %v1093 = vmul.f32 %v1087, %v1091
    %1095 = vrot.lane.b32.xlu0 %v1093, 32
    %v1096 = vpop.permute.xlu0 %1095
    %v1098 = vadd.f32 %v1088, %v1096
    %v1099 = vtanh.pop %v1098
    %1101 = vrot.lane.b32.xlu0 %v1099, 64
    %v1102 = vpop.permute.xlu0 %1101
    %v1104 = vmul.f32 %v1087, %v1102
    %v1105 = vmul.f32 %v1040, %v238
    %v1106 = vtanh.pop %v1105
    %v1107 = vmul.f32 %v1106, %v238
    %v1108 = vadd.f32 %v1107, %v239
    %v1109 = vmul.f32 %v1108, %v935
    %1111 = vrot.lane.b32.xlu0 %v1108, 64
    %v1112 = vpop.permute.xlu0 %1111
    %v1114 = vmul.f32 %v1108, %v1112
    %1116 = vrot.lane.b32.xlu0 %v1114, 32
    %v1117 = vpop.permute.xlu0 %1116
    %v1119 = vadd.f32 %v1109, %v1117
    %v1120 = vtanh.pop %v1119
    %1122 = vrot.lane.b32.xlu0 %v1120, 64
    %v1123 = vpop.permute.xlu0 %1122
    %v1125 = vmul.f32 %v1108, %v1123
    %v1126 = vmul.f32 %v1083, %v238
    %v1127 = vtanh.pop %v1126
    %v1128 = vmul.f32 %v1127, %v238
    %v1129 = vadd.f32 %v1128, %v239
    %v1130 = vmul.f32 %v1129, %v956
    %1132 = vrot.lane.b32.xlu0 %v1129, 64
    %v1133 = vpop.permute.xlu0 %1132
    %v1135 = vmul.f32 %v1129, %v1133
    %1137 = vrot.lane.b32.xlu0 %v1135, 32
    %v1138 = vpop.permute.xlu0 %1137
    %v1140 = vadd.f32 %v1130, %v1138
    %v1141 = vtanh.pop %v1140
    %1143 = vrot.lane.b32.xlu0 %v1141, 64
    %v1144 = vpop.permute.xlu0 %1143
    %v1146 = vmul.f32 %v1129, %v1144
    %1148 = vrot.lane.b32.xlu0 %v1146, 32
    %v1149 = vpop.permute.xlu0 %1148
    %1151 = vst.msk [vmem:[#allocation3 + $0x2] sm:$0x1] %vm414, %v1149
    %v1152 = vld [vmem:[#allocation2 + $0x5] sm:$0x1]
    %1154 = vrot.lane.b32.xlu0 %v1104, 32
    %v1155 = vpop.permute.xlu0 %1154
    %v1156 = vsel %vm186, %v1155, 0
    %1158 = vmatpush.msra.mxu0 0.0
    %1159 = vmatpush.msra.mxu0 0.0
    %1160 = vmatpush.msra.mxu0 0.0
    %1161 = vmatpush.msra.mxu0 0.0
    %1162 = vmatpush.msra.mxu0 0.0
    %1163 = vmatpush.msra.mxu0 0.0
    %1164 = vmatpush.msra.mxu0 0.0
    %1165 = vmatpush.msra.mxu0 0.0
    %1166 = vmatpush.msra.mxu0 0.0
    %1167 = vmatpush.msra.mxu0 0.0
    %1168 = vmatpush.msra.mxu0 0.0
    %1169 = vmatpush.msra.mxu0 0.0
    %1170 = vmatpush.msra.mxu0 %v214
    %1171 = vmatpush.msra.mxu0 %v213
    %1172 = vmatpush.msra.mxu0 %v212
    %1173 = vmatpush.msra.mxu0 %v211
    %1174 = vmatmul.f32.gmra.mxu0 %v1156
    %v1175 = vpop.f32.mrf.mxu0
    %v1176 = vadd.f32 0.0, %v1175
    %1177 = vdwg.mxu0
    %v1178 = vadd.f32 %v1152, %v1176
    %1180 = vrot.lane.b32.xlu0 %v1125, 32
    %v1181 = vpop.permute.xlu0 %1180
    %v1182 = vsel %vm186, %v1181, 0
    %1184 = vmatpush.msra.mxu0 0.0
    %1185 = vmatpush.msra.mxu0 0.0
    %1186 = vmatpush.msra.mxu0 0.0
    %1187 = vmatpush.msra.mxu0 0.0
    %1188 = vmatpush.msra.mxu0 0.0
    %1189 = vmatpush.msra.mxu0 0.0
    %1190 = vmatpush.msra.mxu0 0.0
    %1191 = vmatpush.msra.mxu0 0.0
    %1192 = vmatpush.msra.mxu0 0.0
    %1193 = vmatpush.msra.mxu0 0.0
    %1194 = vmatpush.msra.mxu0 0.0
    %1195 = vmatpush.msra.mxu0 0.0
    %1196 = vmatpush.msra.mxu0 %v222
    %1197 = vmatpush.msra.mxu0 %v221
    %1198 = vmatpush.msra.mxu0 %v220
    %1199 = vmatpush.msra.mxu0 %v219
    %1200 = vmatmul.f32.gmra.mxu0 %v1182
    %v1201 = vpop.f32.mrf.mxu0
    %v1202 = vadd.f32 0.0, %v1201
    %1203 = vdwg.mxu0
    %1204 = vmatpush.msra.mxu0 0.0
    %1205 = vmatpush.msra.mxu0 0.0
    %1206 = vmatpush.msra.mxu0 0.0
    %1207 = vmatpush.msra.mxu0 0.0
    %1208 = vmatpush.msra.mxu0 0.0
    %1209 = vmatpush.msra.mxu0 0.0
    %1210 = vmatpush.msra.mxu0 0.0
    %1211 = vmatpush.msra.mxu0 0.0
    %1212 = vmatpush.msra.mxu0 0.0
    %1213 = vmatpush.msra.mxu0 0.0
    %1214 = vmatpush.msra.mxu0 0.0
    %1215 = vmatpush.msra.mxu0 0.0
    %1216 = vmatpush.msra.mxu0 %v218
    %1217 = vmatpush.msra.mxu0 %v217
    %1218 = vmatpush.msra.mxu0 %v216
    %1219 = vmatpush.msra.mxu0 %v215
    %1220 = vmatmul.f32.gmra.mxu0 %v1156
    %v1221 = vpop.f32.mrf.mxu0
    %v1222 = vadd.f32 %v1202, %v1221
    %1223 = vdwg.mxu0
    %v1224 = vadd.f32 %v1222, %v231
    %v1225 = vsel %vm186, %v1149, 0
    %1227 = vmatpush.msra.mxu0 0.0
    %1228 = vmatpush.msra.mxu0 0.0
    %1229 = vmatpush.msra.mxu0 0.0
    %1230 = vmatpush.msra.mxu0 0.0
    %1231 = vmatpush.msra.mxu0 0.0
    %1232 = vmatpush.msra.mxu0 0.0
    %1233 = vmatpush.msra.mxu0 0.0
    %1234 = vmatpush.msra.mxu0 0.0
    %1235 = vmatpush.msra.mxu0 0.0
    %1236 = vmatpush.msra.mxu0 0.0
    %1237 = vmatpush.msra.mxu0 0.0
    %1238 = vmatpush.msra.mxu0 0.0
    %1239 = vmatpush.msra.mxu0 %v230
    %1240 = vmatpush.msra.mxu0 %v229
    %1241 = vmatpush.msra.mxu0 %v228
    %1242 = vmatpush.msra.mxu0 %v227
    %1243 = vmatmul.f32.gmra.mxu0 %v1225
    %v1244 = vpop.f32.mrf.mxu0
    %v1245 = vadd.f32 0.0, %v1244
    %1246 = vdwg.mxu0
    %1247 = vmatpush.msra.mxu0 0.0
    %1248 = vmatpush.msra.mxu0 0.0
    %1249 = vmatpush.msra.mxu0 0.0
    %1250 = vmatpush.msra.mxu0 0.0
    %1251 = vmatpush.msra.mxu0 0.0
    %1252 = vmatpush.msra.mxu0 0.0
    %1253 = vmatpush.msra.mxu0 0.0
    %1254 = vmatpush.msra.mxu0 0.0
    %1255 = vmatpush.msra.mxu0 0.0
    %1256 = vmatpush.msra.mxu0 0.0
    %1257 = vmatpush.msra.mxu0 0.0
    %1258 = vmatpush.msra.mxu0 0.0
    %1259 = vmatpush.msra.mxu0 %v226
    %1260 = vmatpush.msra.mxu0 %v225
    %1261 = vmatpush.msra.mxu0 %v224
    %1262 = vmatpush.msra.mxu0 %v223
    %1263 = vmatmul.f32.gmra.mxu0 %v1182
    %v1264 = vpop.f32.mrf.mxu0
    %v1265 = vadd.f32 %v1245, %v1264
    %1266 = vdwg.mxu0
    %v1267 = vadd.f32 %v1265, %v232
    %v1268 = vmul.f32 %v1178, %v238
    %v1269 = vtanh.pop %v1268
    %v1270 = vmul.f32 %v1269, %v238
    %v1271 = vadd.f32 %v1270, %v239
    %v1272 = vmul.f32 %v1271, %v1098
    %1274 = vrot.lane.b32.xlu0 %v1271, 64
    %v1275 = vpop.permute.xlu0 %1274
    %v1277 = vmul.f32 %v1271, %v1275
    %1279 = vrot.lane.b32.xlu0 %v1277, 32
    %v1280 = vpop.permute.xlu0 %1279
    %v1282 = vadd.f32 %v1272, %v1280
    %v1283 = vtanh.pop %v1282
    %1285 = vrot.lane.b32.xlu0 %v1283, 64
    %v1286 = vpop.permute.xlu0 %1285
    %v1288 = vmul.f32 %v1271, %v1286
    %v1289 = vmul.f32 %v1224, %v238
    %v1290 = vtanh.pop %v1289
    %v1291 = vmul.f32 %v1290, %v238
    %v1292 = vadd.f32 %v1291, %v239
    %v1293 = vmul.f32 %v1292, %v1119
    %1295 = vrot.lane.b32.xlu0 %v1292, 64
    %v1296 = vpop.permute.xlu0 %1295
    %v1298 = vmul.f32 %v1292, %v1296
    %1300 = vrot.lane.b32.xlu0 %v1298, 32
    %v1301 = vpop.permute.xlu0 %1300
    %v1303 = vadd.f32 %v1293, %v1301
    %v1304 = vtanh.pop %v1303
    %1306 = vrot.lane.b32.xlu0 %v1304, 64
    %v1307 = vpop.permute.xlu0 %1306
    %v1309 = vmul.f32 %v1292, %v1307
    %v1310 = vmul.f32 %v1267, %v238
    %v1311 = vtanh.pop %v1310
    %v1312 = vmul.f32 %v1311, %v238
    %v1313 = vadd.f32 %v1312, %v239
    %v1314 = vmul.f32 %v1313, %v1140
    %1316 = vrot.lane.b32.xlu0 %v1313, 64
    %v1317 = vpop.permute.xlu0 %1316
    %v1319 = vmul.f32 %v1313, %v1317
    %1321 = vrot.lane.b32.xlu0 %v1319, 32
    %v1322 = vpop.permute.xlu0 %1321
    %v1324 = vadd.f32 %v1314, %v1322
    %v1325 = vtanh.pop %v1324
    %1327 = vrot.lane.b32.xlu0 %v1325, 64
    %v1328 = vpop.permute.xlu0 %1327
    %v1330 = vmul.f32 %v1313, %v1328
    %1332 = vrot.lane.b32.xlu0 %v1330, 32
    %v1333 = vpop.permute.xlu0 %1332
    %1335 = vst.msk [vmem:[#allocation3 + $0x3] sm:$0x1] %vm414, %v1333
    %v1336 = vld [vmem:[#allocation2 + $0x6] sm:$0x1]
    %1338 = vrot.lane.b32.xlu0 %v1288, 32
    %v1339 = vpop.permute.xlu0 %1338
    %v1340 = vsel %vm186, %v1339, 0
    %1342 = vmatpush.msra.mxu0 0.0
    %1343 = vmatpush.msra.mxu0 0.0
    %1344 = vmatpush.msra.mxu0 0.0
    %1345 = vmatpush.msra.mxu0 0.0
    %1346 = vmatpush.msra.mxu0 0.0
    %1347 = vmatpush.msra.mxu0 0.0
    %1348 = vmatpush.msra.mxu0 0.0
    %1349 = vmatpush.msra.mxu0 0.0
    %1350 = vmatpush.msra.mxu0 0.0
    %1351 = vmatpush.msra.mxu0 0.0
    %1352 = vmatpush.msra.mxu0 0.0
    %1353 = vmatpush.msra.mxu0 0.0
    %1354 = vmatpush.msra.mxu0 %v214
    %1355 = vmatpush.msra.mxu0 %v213
    %1356 = vmatpush.msra.mxu0 %v212
    %1357 = vmatpush.msra.mxu0 %v211
    %1358 = vmatmul.f32.gmra.mxu0 %v1340
    %v1359 = vpop.f32.mrf.mxu0
    %v1360 = vadd.f32 0.0, %v1359
    %1361 = vdwg.mxu0
    %v1362 = vadd.f32 %v1336, %v1360
    %1364 = vrot.lane.b32.xlu0 %v1309, 32
    %v1365 = vpop.permute.xlu0 %1364
    %v1366 = vsel %vm186, %v1365, 0
    %1368 = vmatpush.msra.mxu0 0.0
    %1369 = vmatpush.msra.mxu0 0.0
    %1370 = vmatpush.msra.mxu0 0.0
    %1371 = vmatpush.msra.mxu0 0.0
    %1372 = vmatpush.msra.mxu0 0.0
    %1373 = vmatpush.msra.mxu0 0.0
    %1374 = vmatpush.msra.mxu0 0.0
    %1375 = vmatpush.msra.mxu0 0.0
    %1376 = vmatpush.msra.mxu0 0.0
    %1377 = vmatpush.msra.mxu0 0.0
    %1378 = vmatpush.msra.mxu0 0.0
    %1379 = vmatpush.msra.mxu0 0.0
    %1380 = vmatpush.msra.mxu0 %v222
    %1381 = vmatpush.msra.mxu0 %v221
    %1382 = vmatpush.msra.mxu0 %v220
    %1383 = vmatpush.msra.mxu0 %v219
    %1384 = vmatmul.f32.gmra.mxu0 %v1366
    %v1385 = vpop.f32.mrf.mxu0
    %v1386 = vadd.f32 0.0, %v1385
    %1387 = vdwg.mxu0
    %1388 = vmatpush.msra.mxu0 0.0
    %1389 = vmatpush.msra.mxu0 0.0
    %1390 = vmatpush.msra.mxu0 0.0
    %1391 = vmatpush.msra.mxu0 0.0
    %1392 = vmatpush.msra.mxu0 0.0
    %1393 = vmatpush.msra.mxu0 0.0
    %1394 = vmatpush.msra.mxu0 0.0
    %1395 = vmatpush.msra.mxu0 0.0
    %1396 = vmatpush.msra.mxu0 0.0
    %1397 = vmatpush.msra.mxu0 0.0
    %1398 = vmatpush.msra.mxu0 0.0
    %1399 = vmatpush.msra.mxu0 0.0
    %1400 = vmatpush.msra.mxu0 %v218
    %1401 = vmatpush.msra.mxu0 %v217
    %1402 = vmatpush.msra.mxu0 %v216
    %1403 = vmatpush.msra.mxu0 %v215
    %1404 = vmatmul.f32.gmra.mxu0 %v1340
    %v1405 = vpop.f32.mrf.mxu0
    %v1406 = vadd.f32 %v1386, %v1405
    %1407 = vdwg.mxu0
    %v1408 = vadd.f32 %v1406, %v231
    %v1409 = vsel %vm186, %v1333, 0
    %1411 = vmatpush.msra.mxu0 0.0
    %1412 = vmatpush.msra.mxu0 0.0
    %1413 = vmatpush.msra.mxu0 0.0
    %1414 = vmatpush.msra.mxu0 0.0
    %1415 = vmatpush.msra.mxu0 0.0
    %1416 = vmatpush.msra.mxu0 0.0
    %1417 = vmatpush.msra.mxu0 0.0
    %1418 = vmatpush.msra.mxu0 0.0
    %1419 = vmatpush.msra.mxu0 0.0
    %1420 = vmatpush.msra.mxu0 0.0
    %1421 = vmatpush.msra.mxu0 0.0
    %1422 = vmatpush.msra.mxu0 0.0
    %1423 = vmatpush.msra.mxu0 %v230
    %1424 = vmatpush.msra.mxu0 %v229
    %1425 = vmatpush.msra.mxu0 %v228
    %1426 = vmatpush.msra.mxu0 %v227
    %1427 = vmatmul.f32.gmra.mxu0 %v1409
    %v1428 = vpop.f32.mrf.mxu0
    %v1429 = vadd.f32 0.0, %v1428
    %1430 = vdwg.mxu0
    %1431 = vmatpush.msra.mxu0 0.0
    %1432 = vmatpush.msra.mxu0 0.0
    %1433 = vmatpush.msra.mxu0 0.0
    %1434 = vmatpush.msra.mxu0 0.0
    %1435 = vmatpush.msra.mxu0 0.0
    %1436 = vmatpush.msra.mxu0 0.0
    %1437 = vmatpush.msra.mxu0 0.0
    %1438 = vmatpush.msra.mxu0 0.0
    %1439 = vmatpush.msra.mxu0 0.0
    %1440 = vmatpush.msra.mxu0 0.0
    %1441 = vmatpush.msra.mxu0 0.0
    %1442 = vmatpush.msra.mxu0 0.0
    %1443 = vmatpush.msra.mxu0 %v226
    %1444 = vmatpush.msra.mxu0 %v225
    %1445 = vmatpush.msra.mxu0 %v224
    %1446 = vmatpush.msra.mxu0 %v223
    %1447 = vmatmul.f32.gmra.mxu0 %v1366
    %v1448 = vpop.f32.mrf.mxu0
    %v1449 = vadd.f32 %v1429, %v1448
    %1450 = vdwg.mxu0
    %v1451 = vadd.f32 %v1449, %v232
    %v1452 = vmul.f32 %v1362, %v238
    %v1453 = vtanh.pop %v1452
    %v1454 = vmul.f32 %v1453, %v238
    %v1455 = vadd.f32 %v1454, %v239
    %v1456 = vmul.f32 %v1455, %v1282
    %1458 = vrot.lane.b32.xlu0 %v1455, 64
    %v1459 = vpop.permute.xlu0 %1458
    %v1461 = vmul.f32 %v1455, %v1459
    %1463 = vrot.lane.b32.xlu0 %v1461, 32
    %v1464 = vpop.permute.xlu0 %1463
    %v1466 = vadd.f32 %v1456, %v1464
    %v1467 = vtanh.pop %v1466
    %1469 = vrot.lane.b32.xlu0 %v1467, 64
    %v1470 = vpop.permute.xlu0 %1469
    %v1472 = vmul.f32 %v1455, %v1470
    %v1473 = vmul.f32 %v1408, %v238
    %v1474 = vtanh.pop %v1473
    %v1475 = vmul.f32 %v1474, %v238
    %v1476 = vadd.f32 %v1475, %v239
    %v1477 = vmul.f32 %v1476, %v1303
    %1479 = vrot.lane.b32.xlu0 %v1476, 64
    %v1480 = vpop.permute.xlu0 %1479
    %v1482 = vmul.f32 %v1476, %v1480
    %1484 = vrot.lane.b32.xlu0 %v1482, 32
    %v1485 = vpop.permute.xlu0 %1484
    %v1487 = vadd.f32 %v1477, %v1485
    %v1488 = vtanh.pop %v1487
    %1490 = vrot.lane.b32.xlu0 %v1488, 64
    %v1491 = vpop.permute.xlu0 %1490
    %v1493 = vmul.f32 %v1476, %v1491
    %v1494 = vmul.f32 %v1451, %v238
    %v1495 = vtanh.pop %v1494
    %v1496 = vmul.f32 %v1495, %v238
    %v1497 = vadd.f32 %v1496, %v239
    %v1498 = vmul.f32 %v1497, %v1324
    %1500 = vrot.lane.b32.xlu0 %v1497, 64
    %v1501 = vpop.permute.xlu0 %1500
    %v1503 = vmul.f32 %v1497, %v1501
    %1505 = vrot.lane.b32.xlu0 %v1503, 32
    %v1506 = vpop.permute.xlu0 %1505
    %v1508 = vadd.f32 %v1498, %v1506
    %v1509 = vtanh.pop %v1508
    %1511 = vrot.lane.b32.xlu0 %v1509, 64
    %v1512 = vpop.permute.xlu0 %1511
    %v1514 = vmul.f32 %v1497, %v1512
    %1516 = vrot.lane.b32.xlu0 %v1514, 32
    %v1517 = vpop.permute.xlu0 %1516
    %1519 = vst.msk [vmem:[#allocation3 + $0x4] sm:$0x1] %vm414, %v1517
    %v1520 = vld [vmem:[#allocation2 + $0x7] sm:$0x1]
    %1522 = vrot.lane.b32.xlu0 %v1472, 32
    %v1523 = vpop.permute.xlu0 %1522
    %v1524 = vsel %vm186, %v1523, 0
    %1526 = vmatpush.msra.mxu0 0.0
    %1527 = vmatpush.msra.mxu0 0.0
    %1528 = vmatpush.msra.mxu0 0.0
    %1529 = vmatpush.msra.mxu0 0.0
    %1530 = vmatpush.msra.mxu0 0.0
    %1531 = vmatpush.msra.mxu0 0.0
    %1532 = vmatpush.msra.mxu0 0.0
    %1533 = vmatpush.msra.mxu0 0.0
    %1534 = vmatpush.msra.mxu0 0.0
    %1535 = vmatpush.msra.mxu0 0.0
    %1536 = vmatpush.msra.mxu0 0.0
    %1537 = vmatpush.msra.mxu0 0.0
    %1538 = vmatpush.msra.mxu0 %v214
    %1539 = vmatpush.msra.mxu0 %v213
    %1540 = vmatpush.msra.mxu0 %v212
    %1541 = vmatpush.msra.mxu0 %v211
    %1542 = vmatmul.f32.gmra.mxu0 %v1524
    %v1543 = vpop.f32.mrf.mxu0
    %v1544 = vadd.f32 0.0, %v1543
    %1545 = vdwg.mxu0
    %v1546 = vadd.f32 %v1520, %v1544
    %1548 = vrot.lane.b32.xlu0 %v1493, 32
    %v1549 = vpop.permute.xlu0 %1548
    %v1550 = vsel %vm186, %v1549, 0
    %1552 = vmatpush.msra.mxu0 0.0
    %1553 = vmatpush.msra.mxu0 0.0
    %1554 = vmatpush.msra.mxu0 0.0
    %1555 = vmatpush.msra.mxu0 0.0
    %1556 = vmatpush.msra.mxu0 0.0
    %1557 = vmatpush.msra.mxu0 0.0
    %1558 = vmatpush.msra.mxu0 0.0
    %1559 = vmatpush.msra.mxu0 0.0
    %1560 = vmatpush.msra.mxu0 0.0
    %1561 = vmatpush.msra.mxu0 0.0
    %1562 = vmatpush.msra.mxu0 0.0
    %1563 = vmatpush.msra.mxu0 0.0
    %1564 = vmatpush.msra.mxu0 %v222
    %1565 = vmatpush.msra.mxu0 %v221
    %1566 = vmatpush.msra.mxu0 %v220
    %1567 = vmatpush.msra.mxu0 %v219
    %1568 = vmatmul.f32.gmra.mxu0 %v1550
    %v1569 = vpop.f32.mrf.mxu0
    %v1570 = vadd.f32 0.0, %v1569
    %1571 = vdwg.mxu0
    %1572 = vmatpush.msra.mxu0 0.0
    %1573 = vmatpush.msra.mxu0 0.0
    %1574 = vmatpush.msra.mxu0 0.0
    %1575 = vmatpush.msra.mxu0 0.0
    %1576 = vmatpush.msra.mxu0 0.0
    %1577 = vmatpush.msra.mxu0 0.0
    %1578 = vmatpush.msra.mxu0 0.0
    %1579 = vmatpush.msra.mxu0 0.0
    %1580 = vmatpush.msra.mxu0 0.0
    %1581 = vmatpush.msra.mxu0 0.0
    %1582 = vmatpush.msra.mxu0 0.0
    %1583 = vmatpush.msra.mxu0 0.0
    %1584 = vmatpush.msra.mxu0 %v218
    %1585 = vmatpush.msra.mxu0 %v217
    %1586 = vmatpush.msra.mxu0 %v216
    %1587 = vmatpush.msra.mxu0 %v215
    %1588 = vmatmul.f32.gmra.mxu0 %v1524
    %v1589 = vpop.f32.mrf.mxu0
    %v1590 = vadd.f32 %v1570, %v1589
    %1591 = vdwg.mxu0
    %v1592 = vadd.f32 %v1590, %v231
    %v1593 = vsel %vm186, %v1517, 0
    %1595 = vmatpush.msra.mxu0 0.0
    %1596 = vmatpush.msra.mxu0 0.0
    %1597 = vmatpush.msra.mxu0 0.0
    %1598 = vmatpush.msra.mxu0 0.0
    %1599 = vmatpush.msra.mxu0 0.0
    %1600 = vmatpush.msra.mxu0 0.0
    %1601 = vmatpush.msra.mxu0 0.0
    %1602 = vmatpush.msra.mxu0 0.0
    %1603 = vmatpush.msra.mxu0 0.0
    %1604 = vmatpush.msra.mxu0 0.0
    %1605 = vmatpush.msra.mxu0 0.0
    %1606 = vmatpush.msra.mxu0 0.0
    %1607 = vmatpush.msra.mxu0 %v230
    %1608 = vmatpush.msra.mxu0 %v229
    %1609 = vmatpush.msra.mxu0 %v228
    %1610 = vmatpush.msra.mxu0 %v227
    %1611 = vmatmul.f32.gmra.mxu0 %v1593
    %v1612 = vpop.f32.mrf.mxu0
    %v1613 = vadd.f32 0.0, %v1612
    %1614 = vdwg.mxu0
    %1615 = vmatpush.msra.mxu0 0.0
    %1616 = vmatpush.msra.mxu0 0.0
    %1617 = vmatpush.msra.mxu0 0.0
    %1618 = vmatpush.msra.mxu0 0.0
    %1619 = vmatpush.msra.mxu0 0.0
    %1620 = vmatpush.msra.mxu0 0.0
    %1621 = vmatpush.msra.mxu0 0.0
    %1622 = vmatpush.msra.mxu0 0.0
    %1623 = vmatpush.msra.mxu0 0.0
    %1624 = vmatpush.msra.mxu0 0.0
    %1625 = vmatpush.msra.mxu0 0.0
    %1626 = vmatpush.msra.mxu0 0.0
    %1627 = vmatpush.msra.mxu0 %v226
    %1628 = vmatpush.msra.mxu0 %v225
    %1629 = vmatpush.msra.mxu0 %v224
    %1630 = vmatpush.msra.mxu0 %v223
    %1631 = vmatmul.f32.gmra.mxu0 %v1550
    %v1632 = vpop.f32.mrf.mxu0
    %v1633 = vadd.f32 %v1613, %v1632
    %1634 = vdwg.mxu0
    %v1635 = vadd.f32 %v1633, %v232
    %v1636 = vmul.f32 %v1546, %v238
    %v1637 = vtanh.pop %v1636
    %v1638 = vmul.f32 %v1637, %v238
    %v1639 = vadd.f32 %v1638, %v239
    %v1640 = vmul.f32 %v1639, %v1466
    %1642 = vrot.lane.b32.xlu0 %v1639, 64
    %v1643 = vpop.permute.xlu0 %1642
    %v1645 = vmul.f32 %v1639, %v1643
    %1647 = vrot.lane.b32.xlu0 %v1645, 32
    %v1648 = vpop.permute.xlu0 %1647
    %v1650 = vadd.f32 %v1640, %v1648
    %v1651 = vtanh.pop %v1650
    %1653 = vrot.lane.b32.xlu0 %v1651, 64
    %v1654 = vpop.permute.xlu0 %1653
    %v1656 = vmul.f32 %v1639, %v1654
    %v1657 = vmul.f32 %v1592, %v238
    %v1658 = vtanh.pop %v1657
    %v1659 = vmul.f32 %v1658, %v238
    %v1660 = vadd.f32 %v1659, %v239
    %v1661 = vmul.f32 %v1660, %v1487
    %1663 = vrot.lane.b32.xlu0 %v1660, 64
    %v1664 = vpop.permute.xlu0 %1663
    %v1666 = vmul.f32 %v1660, %v1664
    %1668 = vrot.lane.b32.xlu0 %v1666, 32
    %v1669 = vpop.permute.xlu0 %1668
    %v1671 = vadd.f32 %v1661, %v1669
    %v1672 = vtanh.pop %v1671
    %1674 = vrot.lane.b32.xlu0 %v1672, 64
    %v1675 = vpop.permute.xlu0 %1674
    %v1677 = vmul.f32 %v1660, %v1675
    %v1678 = vmul.f32 %v1635, %v238
    %v1679 = vtanh.pop %v1678
    %v1680 = vmul.f32 %v1679, %v238
    %v1681 = vadd.f32 %v1680, %v239
    %v1682 = vmul.f32 %v1681, %v1508
    %1684 = vrot.lane.b32.xlu0 %v1681, 64
    %v1685 = vpop.permute.xlu0 %1684
    %v1687 = vmul.f32 %v1681, %v1685
    %1689 = vrot.lane.b32.xlu0 %v1687, 32
    %v1690 = vpop.permute.xlu0 %1689
    %v1692 = vadd.f32 %v1682, %v1690
    %v1693 = vtanh.pop %v1692
    %1695 = vrot.lane.b32.xlu0 %v1693, 64
    %v1696 = vpop.permute.xlu0 %1695
    %v1698 = vmul.f32 %v1681, %v1696
    %1700 = vrot.lane.b32.xlu0 %v1698, 32
    %v1701 = vpop.permute.xlu0 %1700
    %1703 = vst.msk [vmem:[#allocation3 + $0x5] sm:$0x1] %vm414, %v1701
    %1705 = vrot.lane.b32.xlu0 %v1677, 32
    %v1706 = vpop.permute.xlu0 %1705
    %v1707 = vsel %vm186, %v1706, 0
    %1709 = vmatpush.msra.mxu0 0.0
    %1710 = vmatpush.msra.mxu0 0.0
    %1711 = vmatpush.msra.mxu0 0.0
    %1712 = vmatpush.msra.mxu0 0.0
    %1713 = vmatpush.msra.mxu0 0.0
    %1714 = vmatpush.msra.mxu0 0.0
    %1715 = vmatpush.msra.mxu0 0.0
    %1716 = vmatpush.msra.mxu0 0.0
    %1717 = vmatpush.msra.mxu0 0.0
    %1718 = vmatpush.msra.mxu0 0.0
    %1719 = vmatpush.msra.mxu0 0.0
    %1720 = vmatpush.msra.mxu0 0.0
    %1721 = vmatpush.msra.mxu0 %v222
    %1722 = vmatpush.msra.mxu0 %v221
    %1723 = vmatpush.msra.mxu0 %v220
    %1724 = vmatpush.msra.mxu0 %v219
    %1725 = vmatmul.f32.gmra.mxu0 %v1707
    %v1726 = vpop.f32.mrf.mxu0
    %v1727 = vadd.f32 0.0, %v1726
    %1728 = vdwg.mxu0
    %1730 = vrot.lane.b32.xlu0 %v1656, 32
    %v1731 = vpop.permute.xlu0 %1730
    %v1732 = vsel %vm186, %v1731, 0
    %1734 = vmatpush.msra.mxu0 0.0
    %1735 = vmatpush.msra.mxu0 0.0
    %1736 = vmatpush.msra.mxu0 0.0
    %1737 = vmatpush.msra.mxu0 0.0
    %1738 = vmatpush.msra.mxu0 0.0
    %1739 = vmatpush.msra.mxu0 0.0
    %1740 = vmatpush.msra.mxu0 0.0
    %1741 = vmatpush.msra.mxu0 0.0
    %1742 = vmatpush.msra.mxu0 0.0
    %1743 = vmatpush.msra.mxu0 0.0
    %1744 = vmatpush.msra.mxu0 0.0
    %1745 = vmatpush.msra.mxu0 0.0
    %1746 = vmatpush.msra.mxu0 %v218
    %1747 = vmatpush.msra.mxu0 %v217
    %1748 = vmatpush.msra.mxu0 %v216
    %1749 = vmatpush.msra.mxu0 %v215
    %1750 = vmatmul.f32.gmra.mxu0 %v1732
    %v1751 = vpop.f32.mrf.mxu0
    %v1752 = vadd.f32 %v1727, %v1751
    %1753 = vdwg.mxu0
    %v1754 = vadd.f32 %v1752, %v231
    %v1755 = vsel %vm186, %v1701, 0
    %1757 = vmatpush.msra.mxu0 0.0
    %1758 = vmatpush.msra.mxu0 0.0
    %1759 = vmatpush.msra.mxu0 0.0
    %1760 = vmatpush.msra.mxu0 0.0
    %1761 = vmatpush.msra.mxu0 0.0
    %1762 = vmatpush.msra.mxu0 0.0
    %1763 = vmatpush.msra.mxu0 0.0
    %1764 = vmatpush.msra.mxu0 0.0
    %1765 = vmatpush.msra.mxu0 0.0
    %1766 = vmatpush.msra.mxu0 0.0
    %1767 = vmatpush.msra.mxu0 0.0
    %1768 = vmatpush.msra.mxu0 0.0
    %1769 = vmatpush.msra.mxu0 %v230
    %1770 = vmatpush.msra.mxu0 %v229
    %1771 = vmatpush.msra.mxu0 %v228
    %1772 = vmatpush.msra.mxu0 %v227
    %1773 = vmatmul.f32.gmra.mxu0 %v1755
    %v1774 = vpop.f32.mrf.mxu0
    %v1775 = vadd.f32 0.0, %v1774
    %1776 = vdwg.mxu0
    %1777 = vmatpush.msra.mxu0 0.0
    %1778 = vmatpush.msra.mxu0 0.0
    %1779 = vmatpush.msra.mxu0 0.0
    %1780 = vmatpush.msra.mxu0 0.0
    %1781 = vmatpush.msra.mxu0 0.0
    %1782 = vmatpush.msra.mxu0 0.0
    %1783 = vmatpush.msra.mxu0 0.0
    %1784 = vmatpush.msra.mxu0 0.0
    %1785 = vmatpush.msra.mxu0 0.0
    %1786 = vmatpush.msra.mxu0 0.0
    %1787 = vmatpush.msra.mxu0 0.0
    %1788 = vmatpush.msra.mxu0 0.0
    %1789 = vmatpush.msra.mxu0 %v226
    %1790 = vmatpush.msra.mxu0 %v225
    %1791 = vmatpush.msra.mxu0 %v224
    %1792 = vmatpush.msra.mxu0 %v223
    %1793 = vmatmul.f32.gmra.mxu0 %v1707
    %v1794 = vpop.f32.mrf.mxu0
    %v1795 = vadd.f32 %v1775, %v1794
    %1796 = vdwg.mxu0
    %v1797 = vadd.f32 %v1795, %v232
    %v1798 = vmul.f32 %v1754, %v238
    %v1799 = vtanh.pop %v1798
    %v1800 = vmul.f32 %v1799, %v238
    %v1801 = vadd.f32 %v1800, %v239
    %v1802 = vmul.f32 %v1801, %v1671
    %1804 = vrot.lane.b32.xlu0 %v1801, 64
    %v1805 = vpop.permute.xlu0 %1804
    %v1807 = vmul.f32 %v1801, %v1805
    %1809 = vrot.lane.b32.xlu0 %v1807, 32
    %v1810 = vpop.permute.xlu0 %1809
    %v1812 = vadd.f32 %v1802, %v1810
    %v1813 = vtanh.pop %v1812
    %1815 = vrot.lane.b32.xlu0 %v1813, 64
    %v1816 = vpop.permute.xlu0 %1815
    %v1818 = vmul.f32 %v1801, %v1816
    %v1819 = vmul.f32 %v1797, %v238
    %v1820 = vtanh.pop %v1819
    %v1821 = vmul.f32 %v1820, %v238
    %v1822 = vadd.f32 %v1821, %v239
    %v1823 = vmul.f32 %v1822, %v1692
    %1825 = vrot.lane.b32.xlu0 %v1822, 64
    %v1826 = vpop.permute.xlu0 %1825
    %v1828 = vmul.f32 %v1822, %v1826
    %1830 = vrot.lane.b32.xlu0 %v1828, 32
    %v1831 = vpop.permute.xlu0 %1830
    %v1833 = vadd.f32 %v1823, %v1831
    %v1834 = vtanh.pop %v1833
    %1836 = vrot.lane.b32.xlu0 %v1834, 64
    %v1837 = vpop.permute.xlu0 %1836
    %v1839 = vmul.f32 %v1822, %v1837
    %1841 = vrot.lane.b32.xlu0 %v1839, 32
    %v1842 = vpop.permute.xlu0 %1841
    %1844 = vst.msk [vmem:[#allocation3 + $0x6] sm:$0x1] %vm414, %v1842
    %v1845 = vsel %vm186, %v1842, 0
    %1847 = vmatpush.msra.mxu0 0.0
    %1848 = vmatpush.msra.mxu0 0.0
    %1849 = vmatpush.msra.mxu0 0.0
    %1850 = vmatpush.msra.mxu0 0.0
    %1851 = vmatpush.msra.mxu0 0.0
    %1852 = vmatpush.msra.mxu0 0.0
    %1853 = vmatpush.msra.mxu0 0.0
    %1854 = vmatpush.msra.mxu0 0.0
    %1855 = vmatpush.msra.mxu0 0.0
    %1856 = vmatpush.msra.mxu0 0.0
    %1857 = vmatpush.msra.mxu0 0.0
    %1858 = vmatpush.msra.mxu0 0.0
    %1859 = vmatpush.msra.mxu0 %v230
    %1860 = vmatpush.msra.mxu0 %v229
    %1861 = vmatpush.msra.mxu0 %v228
    %1862 = vmatpush.msra.mxu0 %v227
    %1863 = vmatmul.f32.gmra.mxu0 %v1845
    %v1864 = vpop.f32.mrf.mxu0
    %v1865 = vadd.f32 0.0, %v1864
    %1866 = vdwg.mxu0
    %1868 = vrot.lane.b32.xlu0 %v1818, 32
    %v1869 = vpop.permute.xlu0 %1868
    %v1870 = vsel %vm186, %v1869, 0
    %1872 = vmatpush.msra.mxu0 0.0
    %1873 = vmatpush.msra.mxu0 0.0
    %1874 = vmatpush.msra.mxu0 0.0
    %1875 = vmatpush.msra.mxu0 0.0
    %1876 = vmatpush.msra.mxu0 0.0
    %1877 = vmatpush.msra.mxu0 0.0
    %1878 = vmatpush.msra.mxu0 0.0
    %1879 = vmatpush.msra.mxu0 0.0
    %1880 = vmatpush.msra.mxu0 0.0
    %1881 = vmatpush.msra.mxu0 0.0
    %1882 = vmatpush.msra.mxu0 0.0
    %1883 = vmatpush.msra.mxu0 0.0
    %1884 = vmatpush.msra.mxu0 %v226
    %1885 = vmatpush.msra.mxu0 %v225
    %1886 = vmatpush.msra.mxu0 %v224
    %1887 = vmatpush.msra.mxu0 %v223
    %1888 = vmatmul.f32.gmra.mxu0 %v1870
    %v1889 = vpop.f32.mrf.mxu0
    %v1890 = vadd.f32 %v1865, %v1889
    %1891 = vdwg.mxu0
    %v1892 = vadd.f32 %v1890, %v232
    %v1893 = vmul.f32 %v1892, %v238
    %v1894 = vtanh.pop %v1893
    %v1895 = vmul.f32 %v1894, %v238
    %v1896 = vadd.f32 %v1895, %v239
    %v1897 = vmul.f32 %v1896, %v1833
    %1899 = vrot.lane.b32.xlu0 %v1896, 64
    %v1900 = vpop.permute.xlu0 %1899
    %v1902 = vmul.f32 %v1896, %v1900
    %1904 = vrot.lane.b32.xlu0 %v1902, 32
    %v1905 = vpop.permute.xlu0 %1904
    %v1907 = vadd.f32 %v1897, %v1905
    %v1908 = vtanh.pop %v1907
    %1910 = vrot.lane.b32.xlu0 %v1908, 64
    %v1911 = vpop.permute.xlu0 %1910
    %v1913 = vmul.f32 %v1896, %v1911
    %1915 = vrot.lane.b32.xlu0 %v1913, 32
    %v1916 = vpop.permute.xlu0 %1915
    %1918 = vst.msk [vmem:[#allocation3 + $0x7] sm:$0x1] %vm414, %v1916
    %v1919 = vld [vmem:[#allocation3] sm:$0xff]
    %v1920 = vld [vmem:[%s12] sm:$0x1]
    %v1921 = vld [vmem:[#allocation4] sm:$0x1]
    %1923 = vset.pattern.permute.xlu0 0
    %1924 = vperm.xlu0 %1923, %v1921
    %v1925 = vpop.permute.xlu0 %1924
    %v1927 = vperm.slane %v1925, 0
    %v1929 = vsel %vm186, %v1920, 0
    %v1932 = vsel %vm186, %v1919, 0
    %1934 = vmatpush.xpose.msra.mxu0 0.0
    %1935 = vmatpush.xpose.msra.mxu0 0.0
    %1936 = vmatpush.xpose.msra.mxu0 0.0
    %1937 = vmatpush.xpose.msra.mxu0 0.0
    %1938 = vmatpush.xpose.msra.mxu0 0.0
    %1939 = vmatpush.xpose.msra.mxu0 0.0
    %1940 = vmatpush.xpose.msra.mxu0 0.0
    %1941 = vmatpush.xpose.msra.mxu0 0.0
    %1942 = vmatpush.xpose.msra.mxu0 0.0
    %1943 = vmatpush.xpose.msra.mxu0 0.0
    %1944 = vmatpush.xpose.msra.mxu0 0.0
    %1945 = vmatpush.xpose.msra.mxu0 0.0
    %1946 = vmatpush.xpose.msra.mxu0 0.0
    %1947 = vmatpush.xpose.msra.mxu0 0.0
    %1948 = vmatpush.xpose.msra.mxu0 0.0
    %1949 = vmatpush.xpose.msra.mxu0 %v1932
    %1950 = vmatmul.f32.gmra.mxu0 %v1929
    %v1951 = vpop.f32.mrf.mxu0
    %v1952 = vadd.f32 %v1927, %v1951
    %1953 = vdwg.mxu0
    %v1954 = vmax.f32 %v1952, 0.0
    %vm1955 = vcmask 57344
    %1956 = vst.msk [vmem:[#allocation16] sm:$0x1] %vm1955, %v1954
    // Predicated region
    $region82: #{tpu_custom_call.1} parent=1 // pred_check
      _
    $region83: #{tpu_custom_call.1} parent=1 // pred_check_branch
      %1958 = sbr.rel (0) target = $region85
    $region84: #{tpu_custom_call.1} parent=1 // pred_region
      %1960 = vsyncadd [#allocation7], 0
      %s1962 = sshll.u32 [#allocation16], 4
      %s1963 = int_to_ptr.vmem [resolvable:$true] %s1962
      %s1964 = sshll.u32 %s14, 4
      %s1965 = int_to_ptr.hbm [resolvable:$true] %s1964
      %1967 = dma.vmem_to_hbm [thread:$0]  %s1963, 16, %s1965, [#allocation7]
    $region85: #{tpu_custom_call.1} parent=1 // pred_fallthru
      _
    // Predicated region
    $region86: #{tpu_custom_call.1} parent=1 // pred_check
      _
    $region87: #{tpu_custom_call.1} parent=1 // pred_check_branch
      %1969 = sbr.rel (0) target = $region89
    $region88: #{tpu_custom_call.1} parent=1 // pred_region
      %1971 = dma.done [#allocation7], 16
    $region89: #{tpu_custom_call.1} parent=1 // pred_fallthru
      _
    %1972 = vsyncpa [#allocation6], 1
    %1973 = vsyncpa [#allocation9], 1
    %1974 = vsyncpa [#allocation12], 1
    %1975 = vsyncpa [#allocation15], 1
    %1976 = vsyncpa [#allocation7], 1

</llo_original>
